<compile_context>
chip_gen: v7x
topology: tpu7x:2x2x1
jax: 0.10.0
libtpu: 0.0.40
codegen_flags: <defaults>
</compile_context>

<pallas_src>
import functools

import jax
import jax.numpy as jnp
from jax import lax
from jax.experimental import pallas as pl
from jax.experimental.pallas import tpu as pltpu


# ----------------------------------------------------------------------------
# Fused kernel: upsample + pad + concat + (conv3x3 + BN + ReLU) x 2
# ----------------------------------------------------------------------------
def _up_fused_kernel(
    x1_ref, x2pad_ref, wup0_ref, wup1_ref, bup_ref,
    m1_ref, m2_ref, b1_ref, b2_ref, bn_ref, gsel_ref, gselt_ref,
    o_ref,
    x1u_scr, h1_scr,
    *, N, H1, H2, W2, Cout, py0, eps):
  f32 = jnp.float32
  RW = N * W2 * Cout                       # lane width of every activation row
  inv_m = 1.0 / float(N * H2 * W2)
  zrow = jnp.zeros((1, RW), f32)

  # ---- stage 1: ConvTranspose2d(k=2, s=2) + bias, F.pad baked into wup ----
  # One dot per output-row parity; each result row is already a full x2-frame
  # row (F.pad / out-of-range columns are zero columns of wup, bias masked).
  bup = bup_ref[...]
  y0 = jnp.dot(x1_ref[...], wup0_ref[...], preferred_element_type=f32) + bup
  y1 = jnp.dot(x1_ref[...], wup1_ref[...], preferred_element_type=f32) + bup

  # zero only the pad-ring / F.pad rows that stage 1 does not overwrite
  for r in range(0, 1 + py0):
    x1u_scr[r:r + 1, :] = zrow
  for r in range(1 + py0 + 2 * H1, H2 + 2):
    x1u_scr[r:r + 1, :] = zrow
  h1_scr[0:1, :] = zrow
  h1_scr[H2 + 1:H2 + 2, :] = zrow

  # interleave the two parities into the y-padded scratch (full 128-lane rows)
  for i in range(H1):
    r = 1 + py0 + 2 * i
    x1u_scr[r:r + 1, :] = y0[i:i + 1, :]
    x1u_scr[r + 1:r + 2, :] = y1[i:i + 1, :]

  # ---- fused BatchNorm (train-mode batch stats) + ReLU epilogue ------------
  def bn_relu(acc, gamma, beta):
    csum = jnp.sum(acc, axis=0, keepdims=True)
    csq = jnp.sum(acc * acc, axis=0, keepdims=True)
    mean = jnp.dot(csum, gselt_ref[...], preferred_element_type=f32) * inv_m
    ex2 = jnp.dot(csq, gselt_ref[...], preferred_element_type=f32) * inv_m
    var = jnp.maximum(ex2 - mean * mean, 0.0)      # clamp single-pass variance
    sc = gamma * lax.rsqrt(var + eps)
    sh = beta - mean * sc
    sc_row = jnp.dot(sc, gsel_ref[...], preferred_element_type=f32)
    sh_row = jnp.dot(sh, gsel_ref[...], preferred_element_type=f32)
    return jnp.maximum(acc * sc_row + sh_row, 0.0)

  # ---- stage 2: conv1 (3x3, pad 1) on merged [x2 | x1u] K ------------------
  acc = jnp.zeros((H2, RW), f32) + b1_ref[...]
  for dy in range(3):
    lhs = jnp.concatenate(
        [x2pad_ref[dy:dy + H2, :], x1u_scr[dy:dy + H2, :]], axis=1)
    acc = acc + jnp.dot(lhs, m1_ref[dy], preferred_element_type=f32)
  h1_scr[1:H2 + 1, :] = bn_relu(acc, bn_ref[0:1, :], bn_ref[1:2, :])

  # ---- stage 3: conv2 (3x3, pad 1) -----------------------------------------
  acc = jnp.zeros((H2, RW), f32) + b2_ref[...]
  for dy in range(3):
    acc = acc + jnp.dot(h1_scr[dy:dy + H2, :], m2_ref[dy],
                        preferred_element_type=f32)
  o_ref[...] = bn_relu(acc, bn_ref[2:3, :], bn_ref[3:4, :])


# ----------------------------------------------------------------------------
# Wrapper: weight packing (banded, block-diag over batch) + one pallas_call
# ----------------------------------------------------------------------------
def _banded_conv_mats(w_oihw, W, cout, n_batch):
  """(cout, cpart, 3, 3) -> (3, n*W*cpart, n*W*cout), block-diagonal in n.

  Rows ordered (n, x_in, c_in), cols (n, x_out, c_out); x-boundary taps of the
  padding=1 conv are simply absent, so the operand needs no x padding."""
  f32 = jnp.float32
  cpart = w_oihw.shape[1]
  xi = jnp.arange(W)
  xo = jnp.arange(W)
  eye_n = jnp.eye(n_batch, dtype=f32)
  mats = []
  for dy in range(3):
    blk = jnp.zeros((W, cpart, W, cout), f32)
    for dx in range(3):
      mask = (xi[:, None] == xo[None, :] + dx - 1).astype(f32)     # (W, W)
      wmat = jnp.transpose(w_oihw[:, :, dy, dx], (1, 0))           # (cpart, cout)
      blk = blk + mask[:, None, :, None] * wmat[None, :, None, :]
    mats.append(jnp.kron(eye_n, blk.reshape(W * cpart, W * cout)))
  return jnp.stack(mats, axis=0)


def _upsample_mats(wt, W1, W2, cout, n_batch, px0):
  """(cin, cout, 2, 2) -> two (n*W1*cin, n*W2*cout) matrices (dy = 0, 1).

  Columns live in the x2 frame (lane order (n, x, cout)); F.pad's x offset and
  columns outside the upsampled region are zero columns."""
  f32 = jnp.float32
  cin = wt.shape[0]
  j = jnp.arange(W1)
  x = jnp.arange(W2)
  eye_n = jnp.eye(n_batch, dtype=f32)
  mats = []
  for dy in range(2):
    blk = jnp.zeros((W1, cin, W2, cout), f32)
    for dx in range(2):
      mask = (x[None, :] == px0 + 2 * j[:, None] + dx).astype(f32)  # (W1, W2)
      wmat = wt[:, :, dy, dx]                                       # (cin, cout)
      blk = blk + mask[:, None, :, None] * wmat[None, :, None, :]
    mats.append(jnp.kron(eye_n, blk.reshape(W1 * cin, W2 * cout)))
  return mats


def _full_spec(shape):
  nd = len(shape)
  def imap(i):
    del i
    return (0,) * nd
  return pl.BlockSpec(shape, imap)


def up_forward(params, x1_nchw, x2_nchw, eps=1e-5):
  f32 = jnp.float32
  N, Cin, H1, W1 = x1_nchw.shape
  _, C2, H2, W2 = x2_nchw.shape
  Cout = params["up_w"].shape[1]
  diffY, diffX = H2 - 2 * H1, W2 - 2 * W1
  assert diffY >= 0 and diffX >= 0
  py0, px0 = diffY // 2, diffX // 2
  RW = N * W2 * Cout

  # Activations in lane-dense row layout: rows = y, lanes = (n, x, channel).
  x1_rows = jnp.transpose(x1_nchw.astype(f32), (2, 0, 3, 1)).reshape(
      H1, N * W1 * Cin)
  x2_rows = jnp.transpose(x2_nchw.astype(f32), (2, 0, 3, 1)).reshape(
      H2, N * W2 * C2)
  x2pad = jnp.pad(x2_rows, ((1, 1), (0, 0)))          # conv y-ring pre-padded

  # ConvTranspose2d weight -> per-parity matrices with F.pad baked in.
  wup0, wup1 = _upsample_mats(params["up_w"].astype(f32), W1, W2, Cout, N, px0)
  xmask = ((jnp.arange(W2) >= px0) & (jnp.arange(W2) < px0 + 2 * W1))
  bup_row = jnp.tile(
      (xmask.astype(f32)[:, None] * params["up_b"].astype(f32)[None, :]
       ).reshape(1, W2 * Cout), (1, N))

  # 3x3 convs -> banded matrices; conv1's K is the concat [x2 | x1u].
  w1 = params["c1_w"].astype(f32)                     # (Cout, C2 + Cout, 3, 3)
  m1 = jnp.concatenate(
      [_banded_conv_mats(w1[:, :C2], W2, Cout, N),
       _banded_conv_mats(w1[:, C2:], W2, Cout, N)], axis=1)
  m2 = _banded_conv_mats(params["c2_w"].astype(f32), W2, Cout, N)
  b1_row = jnp.tile(params["c1_b"].astype(f32), N * W2).reshape(1, RW)
  b2_row = jnp.tile(params["c2_b"].astype(f32), N * W2).reshape(1, RW)
  bn = jnp.stack([params["bn1_g"], params["bn1_b"],
                  params["bn2_g"], params["bn2_b"]], axis=0).astype(f32)

  # Per-channel gather / broadcast selectors for the fused BN epilogue.
  lane_ch = jnp.arange(RW) % Cout
  gsel = (jnp.arange(Cout)[:, None] == lane_ch[None, :]).astype(f32)
  gselt = jnp.transpose(gsel, (1, 0))

  kernel = functools.partial(
      _up_fused_kernel, N=N, H1=H1, H2=H2, W2=W2, Cout=Cout, py0=py0, eps=eps)

  out_rows = pl.pallas_call(
      kernel,
      out_shape=jax.ShapeDtypeStruct((H2, RW), f32),
      grid=(1,),
      in_specs=[
          _full_spec((H1, N * W1 * Cin)),
          _full_spec((H2 + 2, N * W2 * C2)),
          _full_spec((N * W1 * Cin, RW)),
          _full_spec((N * W1 * Cin, RW)),
          _full_spec((1, RW)),
          _full_spec((3, N * W2 * (C2 + Cout), RW)),
          _full_spec((3, RW, RW)),
          _full_spec((1, RW)),
          _full_spec((1, RW)),
          _full_spec((4, Cout)),
          _full_spec((Cout, RW)),
          _full_spec((RW, Cout)),
      ],
      out_specs=_full_spec((H2, RW)),
      scratch_shapes=[
          pltpu.VMEM((H2 + 2, RW), f32),   # y-padded upsampled + F.padded x1
          pltpu.VMEM((H2 + 2, RW), f32),   # y-padded conv1 output
      ],
      compiler_params=pltpu.CompilerParams(
          dimension_semantics=("arbitrary",)),
  )(x1_rows, x2pad, wup0, wup1, bup_row, m1, m2,
    b1_row, b2_row, bn, gsel, gselt)

  out = out_rows.reshape(H2, N, W2, Cout)
  return jnp.transpose(out, (1, 3, 0, 2))             # back to NCHW


# ----------------------------------------------------------------------------
# Pure-JAX reference (lax convolutions) for a correctness check.
# ----------------------------------------------------------------------------
def up_forward_ref(params, x1_nchw, x2_nchw, eps=1e-5):
  dn = ("NHWC", "HWIO", "NHWC")
  x1 = jnp.transpose(x1_nchw, (0, 2, 3, 1)).astype(jnp.float32)
  x2 = jnp.transpose(x2_nchw, (0, 2, 3, 1)).astype(jnp.float32)

  # transposed conv == forward conv on 2x-dilated input with flipped kernel
  w_t = params["up_w"]                       # (Cin, Cout, 2, 2)
  w_flip = w_t[:, :, ::-1, ::-1]
  w_hwio = jnp.transpose(w_flip, (2, 3, 0, 1))
  x1u = lax.conv_general_dilated(
      x1, w_hwio, (1, 1), ((1, 1), (1, 1)),
      lhs_dilation=(2, 2), dimension_numbers=dn) + params["up_b"]

  diffY = x2.shape[1] - x1u.shape[1]
  diffX = x2.shape[2] - x1u.shape[2]
  x1u = jnp.pad(x1u, ((0, 0),
                      (diffY // 2, diffY - diffY // 2),
                      (diffX // 2, diffX - diffX // 2),
                      (0, 0)))
  x = jnp.concatenate([x2, x1u], axis=-1)

  def conv_bn_relu(h, w_oihw, b, g, bt):
    w_hwio2 = jnp.transpose(w_oihw, (2, 3, 1, 0))
    h = lax.conv_general_dilated(
        h, w_hwio2, (1, 1), ((1, 1), (1, 1)), dimension_numbers=dn) + b
    mean = jnp.mean(h, axis=(0, 1, 2), keepdims=True)
    var = jnp.mean((h - mean) ** 2, axis=(0, 1, 2), keepdims=True)
    h = (h - mean) * lax.rsqrt(var + eps) * g + bt
    return jnp.maximum(h, 0.0)

  h = conv_bn_relu(x, params["c1_w"], params["c1_b"],
                   params["bn1_g"], params["bn1_b"])
  h = conv_bn_relu(h, params["c2_w"], params["c2_b"],
                   params["bn2_g"], params["bn2_b"])
  return jnp.transpose(h, (0, 3, 1, 2))


# ----------------------------------------------------------------------------
if __name__ == "__main__":
  N = 2
  in_channels, out_channels = 8, 4     # Up(in_channels=8, out_channels=4)
  H1 = W1 = 8                          # x1 spatial (gets upsampled 2x)
  H2 = W2 = 16                         # x2 spatial

  key = jax.random.PRNGKey(0)
  ks = jax.random.split(key, 12)

  # PyTorch-layout parameters.
  up_w = 0.2 * jax.random.normal(ks[0], (in_channels, out_channels, 2, 2), jnp.float32)
  up_b = 0.1 * jax.random.normal(ks[1], (out_channels,), jnp.float32)
  c1_w = 0.2 * jax.random.normal(ks[2], (out_channels, in_channels, 3, 3), jnp.float32)
  c1_b = 0.1 * jax.random.normal(ks[3], (out_channels,), jnp.float32)
  bn1_g = 1.0 + 0.1 * jax.random.normal(ks[4], (out_channels,), jnp.float32)
  bn1_b = 0.1 * jax.random.normal(ks[5], (out_channels,), jnp.float32)
  c2_w = 0.2 * jax.random.normal(ks[6], (out_channels, out_channels, 3, 3), jnp.float32)
  c2_b = 0.1 * jax.random.normal(ks[7], (out_channels,), jnp.float32)
  bn2_g = 1.0 + 0.1 * jax.random.normal(ks[8], (out_channels,), jnp.float32)
  bn2_b = 0.1 * jax.random.normal(ks[9], (out_channels,), jnp.float32)

  params = {
      "up_w": up_w, "up_b": up_b,
      "c1_w": c1_w, "c1_b": c1_b, "bn1_g": bn1_g, "bn1_b": bn1_b,
      "c2_w": c2_w, "c2_b": c2_b, "bn2_g": bn2_g, "bn2_b": bn2_b,
  }

  # Inputs follow the PyTorch NCHW convention.
  x1 = jax.random.normal(ks[10], (N, in_channels, H1, W1), jnp.float32)
  x2 = jax.random.normal(ks[11], (N, in_channels - out_channels, H2, W2), jnp.float32)

  out = jax.jit(up_forward)(params, x1, x2)
  out = jax.block_until_ready(out)

  ref = jax.block_until_ready(up_forward_ref(params, x1, x2))
  assert out.shape == (N, out_channels, H2, W2), out.shape
  max_err = float(jnp.max(jnp.abs(out - ref)))
  assert max_err < 2e-3, f"mismatch vs reference: {max_err}"

  print("KERNEL_OK")
</pallas_src>

<mosaic_0001>
module attributes {stable_mosaic.version = 11 : i64} {
  func.func @_up_fused_kernel(%arg0: i32, %arg1: memref<8x128xf32, #tpu.memory_space<vmem>>, %arg2: memref<18x128xf32, #tpu.memory_space<vmem>>, %arg3: memref<128x128xf32, #tpu.memory_space<vmem>>, %arg4: memref<128x128xf32, #tpu.memory_space<vmem>>, %arg5: memref<1x128xf32, #tpu.memory_space<vmem>>, %arg6: memref<3x256x128xf32, #tpu.memory_space<vmem>>, %arg7: memref<3x128x128xf32, #tpu.memory_space<vmem>>, %arg8: memref<1x128xf32, #tpu.memory_space<vmem>>, %arg9: memref<1x128xf32, #tpu.memory_space<vmem>>, %arg10: memref<4x4xf32, #tpu.memory_space<vmem>>, %arg11: memref<4x128xf32, #tpu.memory_space<vmem>>, %arg12: memref<128x4xf32, #tpu.memory_space<vmem>>, %arg13: memref<16x128xf32, #tpu.memory_space<vmem>>, %arg14: memref<18x128xf32, #tpu.memory_space<vmem>>, %arg15: memref<18x128xf32, #tpu.memory_space<vmem>>) attributes {dimension_semantics = [#tpu.dimension_semantics<arbitrary>], iteration_bounds = array<i64: 1>, scalar_prefetch = 0 : i64, scratch_operands = 2 : i64, tpu.core_type = #tpu.core_type<tc>, window_params = [{pipeline_mode = #tpu.pipeline_mode<synchronous>, transform_indices = @transform_0, window_bounds = array<i64: 8, 128>}, {pipeline_mode = #tpu.pipeline_mode<synchronous>, transform_indices = @transform_1, window_bounds = array<i64: 18, 128>}, {pipeline_mode = #tpu.pipeline_mode<synchronous>, transform_indices = @transform_2, window_bounds = array<i64: 128, 128>}, {pipeline_mode = #tpu.pipeline_mode<synchronous>, transform_indices = @transform_3, window_bounds = array<i64: 128, 128>}, {pipeline_mode = #tpu.pipeline_mode<synchronous>, transform_indices = @transform_4, window_bounds = array<i64: 1, 128>}, {pipeline_mode = #tpu.pipeline_mode<synchronous>, transform_indices = @transform_5, window_bounds = array<i64: 3, 256, 128>}, {pipeline_mode = #tpu.pipeline_mode<synchronous>, transform_indices = @transform_6, window_bounds = array<i64: 3, 128, 128>}, {pipeline_mode = #tpu.pipeline_mode<synchronous>, transform_indices = @transform_7, window_bounds = array<i64: 1, 128>}, {pipeline_mode = #tpu.pipeline_mode<synchronous>, transform_indices = @transform_8, window_bounds = array<i64: 1, 128>}, {pipeline_mode = #tpu.pipeline_mode<synchronous>, transform_indices = @transform_9, window_bounds = array<i64: 4, 4>}, {pipeline_mode = #tpu.pipeline_mode<synchronous>, transform_indices = @transform_10, window_bounds = array<i64: 4, 128>}, {pipeline_mode = #tpu.pipeline_mode<synchronous>, transform_indices = @transform_11, window_bounds = array<i64: 128, 4>}, {pipeline_mode = #tpu.pipeline_mode<synchronous>, transform_indices = @transform_12, window_bounds = array<i64: 16, 128>}]} {
    %cst = arith.constant 0.000000e+00 : f32
    %0 = vector.broadcast %cst : f32 to vector<1x128xf32>
    %c0 = arith.constant 0 : index
    %c0_0 = arith.constant 0 : index
    %1 = vector.load %arg5[%c0, %c0_0] : memref<1x128xf32, #tpu.memory_space<vmem>>, vector<1x128xf32>
    %c0_1 = arith.constant 0 : index
    %c0_2 = arith.constant 0 : index
    %2 = vector.load %arg1[%c0_1, %c0_2] : memref<8x128xf32, #tpu.memory_space<vmem>>, vector<8x128xf32>
    %c0_3 = arith.constant 0 : index
    %c0_4 = arith.constant 0 : index
    %3 = vector.load %arg3[%c0_3, %c0_4] : memref<128x128xf32, #tpu.memory_space<vmem>>, vector<128x128xf32>
    %cst_5 = arith.constant dense<0.000000e+00> : vector<8x128xf32>
    %4 = tpu.matmul %2, %3, %cst_5 {dimension_numbers = #tpu.dot_dimension_numbers<[1], [0], [0], [1], [0, 0, 1, 1], [], []>} : vector<8x128xf32>, vector<128x128xf32>, vector<8x128xf32> -> vector<8x128xf32>
    %5 = vector.broadcast %1 : vector<1x128xf32> to vector<8x128xf32>
    %6 = arith.addf %4, %5 : vector<8x128xf32>
    %c0_6 = arith.constant 0 : index
    %c0_7 = arith.constant 0 : index
    %7 = vector.load %arg1[%c0_6, %c0_7] : memref<8x128xf32, #tpu.memory_space<vmem>>, vector<8x128xf32>
    %c0_8 = arith.constant 0 : index
    %c0_9 = arith.constant 0 : index
    %8 = vector.load %arg4[%c0_8, %c0_9] : memref<128x128xf32, #tpu.memory_space<vmem>>, vector<128x128xf32>
    %cst_10 = arith.constant dense<0.000000e+00> : vector<8x128xf32>
    %9 = tpu.matmul %7, %8, %cst_10 {dimension_numbers = #tpu.dot_dimension_numbers<[1], [0], [0], [1], [0, 0, 1, 1], [], []>} : vector<8x128xf32>, vector<128x128xf32>, vector<8x128xf32> -> vector<8x128xf32>
    %10 = vector.broadcast %1 : vector<1x128xf32> to vector<8x128xf32>
    %11 = arith.addf %9, %10 : vector<8x128xf32>
    %c0_11 = arith.constant 0 : index
    %c0_12 = arith.constant 0 : index
    %12 = vector.load %arg14[%c0_11, %c0_12] : memref<18x128xf32, #tpu.memory_space<vmem>>, vector<1x128xf32>
    tpu.vector_store %arg14[%c0_11, %c0_12], %0 {strides = array<i32>} : memref<18x128xf32, #tpu.memory_space<vmem>>, vector<1x128xf32>,
    %c17 = arith.constant 17 : index
    %c0_13 = arith.constant 0 : index
    %13 = vector.load %arg14[%c17, %c0_13] : memref<18x128xf32, #tpu.memory_space<vmem>>, vector<1x128xf32>
    tpu.vector_store %arg14[%c17, %c0_13], %0 {strides = array<i32>} : memref<18x128xf32, #tpu.memory_space<vmem>>, vector<1x128xf32>,
    %c0_14 = arith.constant 0 : index
    %c0_15 = arith.constant 0 : index
    %14 = vector.load %arg15[%c0_14, %c0_15] : memref<18x128xf32, #tpu.memory_space<vmem>>, vector<1x128xf32>
    tpu.vector_store %arg15[%c0_14, %c0_15], %0 {strides = array<i32>} : memref<18x128xf32, #tpu.memory_space<vmem>>, vector<1x128xf32>,
    %c17_16 = arith.constant 17 : index
    %c0_17 = arith.constant 0 : index
    %15 = vector.load %arg15[%c17_16, %c0_17] : memref<18x128xf32, #tpu.memory_space<vmem>>, vector<1x128xf32>
    tpu.vector_store %arg15[%c17_16, %c0_17], %0 {strides = array<i32>} : memref<18x128xf32, #tpu.memory_space<vmem>>, vector<1x128xf32>,
    %16 = vector.extract_strided_slice %6 {offsets = [0, 0], sizes = [1, 128], strides = [1, 1]} : vector<8x128xf32> to vector<1x128xf32>
    %c1 = arith.constant 1 : index
    %c0_18 = arith.constant 0 : index
    %17 = vector.load %arg14[%c1, %c0_18] : memref<18x128xf32, #tpu.memory_space<vmem>>, vector<1x128xf32>
    tpu.vector_store %arg14[%c1, %c0_18], %16 {strides = array<i32>} : memref<18x128xf32, #tpu.memory_space<vmem>>, vector<1x128xf32>,
    %18 = vector.extract_strided_slice %11 {offsets = [0, 0], sizes = [1, 128], strides = [1, 1]} : vector<8x128xf32> to vector<1x128xf32>
    %c2 = arith.constant 2 : index
    %c0_19 = arith.constant 0 : index
    %19 = vector.load %arg14[%c2, %c0_19] : memref<18x128xf32, #tpu.memory_space<vmem>>, vector<1x128xf32>
    tpu.vector_store %arg14[%c2, %c0_19], %18 {strides = array<i32>} : memref<18x128xf32, #tpu.memory_space<vmem>>, vector<1x128xf32>,
    %20 = vector.extract_strided_slice %6 {offsets = [1, 0], sizes = [1, 128], strides = [1, 1]} : vector<8x128xf32> to vector<1x128xf32>
    %c3 = arith.constant 3 : index
    %c0_20 = arith.constant 0 : index
    %21 = vector.load %arg14[%c3, %c0_20] : memref<18x128xf32, #tpu.memory_space<vmem>>, vector<1x128xf32>
    tpu.vector_store %arg14[%c3, %c0_20], %20 {strides = array<i32>} : memref<18x128xf32, #tpu.memory_space<vmem>>, vector<1x128xf32>,
    %22 = vector.extract_strided_slice %11 {offsets = [1, 0], sizes = [1, 128], strides = [1, 1]} : vector<8x128xf32> to vector<1x128xf32>
    %c4 = arith.constant 4 : index
    %c0_21 = arith.constant 0 : index
    %23 = vector.load %arg14[%c4, %c0_21] : memref<18x128xf32, #tpu.memory_space<vmem>>, vector<1x128xf32>
    tpu.vector_store %arg14[%c4, %c0_21], %22 {strides = array<i32>} : memref<18x128xf32, #tpu.memory_space<vmem>>, vector<1x128xf32>,
    %24 = vector.extract_strided_slice %6 {offsets = [2, 0], sizes = [1, 128], strides = [1, 1]} : vector<8x128xf32> to vector<1x128xf32>
    %c5 = arith.constant 5 : index
    %c0_22 = arith.constant 0 : index
    %25 = vector.load %arg14[%c5, %c0_22] : memref<18x128xf32, #tpu.memory_space<vmem>>, vector<1x128xf32>
    tpu.vector_store %arg14[%c5, %c0_22], %24 {strides = array<i32>} : memref<18x128xf32, #tpu.memory_space<vmem>>, vector<1x128xf32>,
    %26 = vector.extract_strided_slice %11 {offsets = [2, 0], sizes = [1, 128], strides = [1, 1]} : vector<8x128xf32> to vector<1x128xf32>
    %c6 = arith.constant 6 : index
    %c0_23 = arith.constant 0 : index
    %27 = vector.load %arg14[%c6, %c0_23] : memref<18x128xf32, #tpu.memory_space<vmem>>, vector<1x128xf32>
    tpu.vector_store %arg14[%c6, %c0_23], %26 {strides = array<i32>} : memref<18x128xf32, #tpu.memory_space<vmem>>, vector<1x128xf32>,
    %28 = vector.extract_strided_slice %6 {offsets = [3, 0], sizes = [1, 128], strides = [1, 1]} : vector<8x128xf32> to vector<1x128xf32>
    %c7 = arith.constant 7 : index
    %c0_24 = arith.constant 0 : index
    %29 = vector.load %arg14[%c7, %c0_24] : memref<18x128xf32, #tpu.memory_space<vmem>>, vector<1x128xf32>
    tpu.vector_store %arg14[%c7, %c0_24], %28 {strides = array<i32>} : memref<18x128xf32, #tpu.memory_space<vmem>>, vector<1x128xf32>,
    %30 = vector.extract_strided_slice %11 {offsets = [3, 0], sizes = [1, 128], strides = [1, 1]} : vector<8x128xf32> to vector<1x128xf32>
    %c8 = arith.constant 8 : index
    %c0_25 = arith.constant 0 : index
    %31 = vector.load %arg14[%c8, %c0_25] : memref<18x128xf32, #tpu.memory_space<vmem>>, vector<1x128xf32>
    tpu.vector_store %arg14[%c8, %c0_25], %30 {strides = array<i32>} : memref<18x128xf32, #tpu.memory_space<vmem>>, vector<1x128xf32>,
    %32 = vector.extract_strided_slice %6 {offsets = [4, 0], sizes = [1, 128], strides = [1, 1]} : vector<8x128xf32> to vector<1x128xf32>
    %c9 = arith.constant 9 : index
    %c0_26 = arith.constant 0 : index
    %33 = vector.load %arg14[%c9, %c0_26] : memref<18x128xf32, #tpu.memory_space<vmem>>, vector<1x128xf32>
    tpu.vector_store %arg14[%c9, %c0_26], %32 {strides = array<i32>} : memref<18x128xf32, #tpu.memory_space<vmem>>, vector<1x128xf32>,
    %34 = vector.extract_strided_slice %11 {offsets = [4, 0], sizes = [1, 128], strides = [1, 1]} : vector<8x128xf32> to vector<1x128xf32>
    %c10 = arith.constant 10 : index
    %c0_27 = arith.constant 0 : index
    %35 = vector.load %arg14[%c10, %c0_27] : memref<18x128xf32, #tpu.memory_space<vmem>>, vector<1x128xf32>
    tpu.vector_store %arg14[%c10, %c0_27], %34 {strides = array<i32>} : memref<18x128xf32, #tpu.memory_space<vmem>>, vector<1x128xf32>,
    %36 = vector.extract_strided_slice %6 {offsets = [5, 0], sizes = [1, 128], strides = [1, 1]} : vector<8x128xf32> to vector<1x128xf32>
    %c11 = arith.constant 11 : index
    %c0_28 = arith.constant 0 : index
    %37 = vector.load %arg14[%c11, %c0_28] : memref<18x128xf32, #tpu.memory_space<vmem>>, vector<1x128xf32>
    tpu.vector_store %arg14[%c11, %c0_28], %36 {strides = array<i32>} : memref<18x128xf32, #tpu.memory_space<vmem>>, vector<1x128xf32>,
    %38 = vector.extract_strided_slice %11 {offsets = [5, 0], sizes = [1, 128], strides = [1, 1]} : vector<8x128xf32> to vector<1x128xf32>
    %c12 = arith.constant 12 : index
    %c0_29 = arith.constant 0 : index
    %39 = vector.load %arg14[%c12, %c0_29] : memref<18x128xf32, #tpu.memory_space<vmem>>, vector<1x128xf32>
    tpu.vector_store %arg14[%c12, %c0_29], %38 {strides = array<i32>} : memref<18x128xf32, #tpu.memory_space<vmem>>, vector<1x128xf32>,
    %40 = vector.extract_strided_slice %6 {offsets = [6, 0], sizes = [1, 128], strides = [1, 1]} : vector<8x128xf32> to vector<1x128xf32>
    %c13 = arith.constant 13 : index
    %c0_30 = arith.constant 0 : index
    %41 = vector.load %arg14[%c13, %c0_30] : memref<18x128xf32, #tpu.memory_space<vmem>>, vector<1x128xf32>
    tpu.vector_store %arg14[%c13, %c0_30], %40 {strides = array<i32>} : memref<18x128xf32, #tpu.memory_space<vmem>>, vector<1x128xf32>,
    %42 = vector.extract_strided_slice %11 {offsets = [6, 0], sizes = [1, 128], strides = [1, 1]} : vector<8x128xf32> to vector<1x128xf32>
    %c14 = arith.constant 14 : index
    %c0_31 = arith.constant 0 : index
    %43 = vector.load %arg14[%c14, %c0_31] : memref<18x128xf32, #tpu.memory_space<vmem>>, vector<1x128xf32>
    tpu.vector_store %arg14[%c14, %c0_31], %42 {strides = array<i32>} : memref<18x128xf32, #tpu.memory_space<vmem>>, vector<1x128xf32>,
    %44 = vector.extract_strided_slice %6 {offsets = [7, 0], sizes = [1, 128], strides = [1, 1]} : vector<8x128xf32> to vector<1x128xf32>
    %c15 = arith.constant 15 : index
    %c0_32 = arith.constant 0 : index
    %45 = vector.load %arg14[%c15, %c0_32] : memref<18x128xf32, #tpu.memory_space<vmem>>, vector<1x128xf32>
    tpu.vector_store %arg14[%c15, %c0_32], %44 {strides = array<i32>} : memref<18x128xf32, #tpu.memory_space<vmem>>, vector<1x128xf32>,
    %46 = vector.extract_strided_slice %11 {offsets = [7, 0], sizes = [1, 128], strides = [1, 1]} : vector<8x128xf32> to vector<1x128xf32>
    %c16 = arith.constant 16 : index
    %c0_33 = arith.constant 0 : index
    %47 = vector.load %arg14[%c16, %c0_33] : memref<18x128xf32, #tpu.memory_space<vmem>>, vector<1x128xf32>
    tpu.vector_store %arg14[%c16, %c0_33], %46 {strides = array<i32>} : memref<18x128xf32, #tpu.memory_space<vmem>>, vector<1x128xf32>,
    %cst_34 = arith.constant 0.000000e+00 : f32
    %48 = vector.broadcast %cst_34 : f32 to vector<16x128xf32>
    %c0_35 = arith.constant 0 : index
    %c0_36 = arith.constant 0 : index
    %49 = vector.load %arg8[%c0_35, %c0_36] : memref<1x128xf32, #tpu.memory_space<vmem>>, vector<1x128xf32>
    %50 = vector.broadcast %49 : vector<1x128xf32> to vector<16x128xf32>
    %51 = arith.addf %48, %50 : vector<16x128xf32>
    %c0_37 = arith.constant 0 : index
    %c0_38 = arith.constant 0 : index
    %52 = vector.load %arg2[%c0_37, %c0_38] : memref<18x128xf32, #tpu.memory_space<vmem>>, vector<16x128xf32>
    %c0_39 = arith.constant 0 : index
    %c0_40 = arith.constant 0 : index
    %53 = vector.load %arg14[%c0_39, %c0_40] : memref<18x128xf32, #tpu.memory_space<vmem>>, vector<16x128xf32>
    %54 = tpu.concatenate %52, %53 in 1 : vector<16x128xf32>, vector<16x128xf32> -> vector<16x256xf32>
    %c0_41 = arith.constant 0 : index
    %c0_42 = arith.constant 0 : index
    %c0_43 = arith.constant 0 : index
    %55 = vector.load %arg6[%c0_41, %c0_42, %c0_43] : memref<3x256x128xf32, #tpu.memory_space<vmem>>, vector<1x256x128xf32>
    %56 = vector.shape_cast %55 : vector<1x256x128xf32> to vector<256x128xf32>
    %cst_44 = arith.constant dense<0.000000e+00> : vector<16x128xf32>
    %57 = tpu.matmul %54, %56, %cst_44 {dimension_numbers = #tpu.dot_dimension_numbers<[1], [0], [0], [1], [0, 0, 1, 1], [], []>} : vector<16x256xf32>, vector<256x128xf32>, vector<16x128xf32> -> vector<16x128xf32>
    %58 = arith.addf %51, %57 : vector<16x128xf32>
    %c1_45 = arith.constant 1 : index
    %c0_46 = arith.constant 0 : index
    %59 = vector.load %arg2[%c1_45, %c0_46] : memref<18x128xf32, #tpu.memory_space<vmem>>, vector<16x128xf32>
    %c1_47 = arith.constant 1 : index
    %c0_48 = arith.constant 0 : index
    %60 = vector.load %arg14[%c1_47, %c0_48] : memref<18x128xf32, #tpu.memory_space<vmem>>, vector<16x128xf32>
    %61 = tpu.concatenate %59, %60 in 1 : vector<16x128xf32>, vector<16x128xf32> -> vector<16x256xf32>
    %c1_49 = arith.constant 1 : index
    %c0_50 = arith.constant 0 : index
    %c0_51 = arith.constant 0 : index
    %62 = vector.load %arg6[%c1_49, %c0_50, %c0_51] : memref<3x256x128xf32, #tpu.memory_space<vmem>>, vector<1x256x128xf32>
    %63 = vector.shape_cast %62 : vector<1x256x128xf32> to vector<256x128xf32>
    %cst_52 = arith.constant dense<0.000000e+00> : vector<16x128xf32>
    %64 = tpu.matmul %61, %63, %cst_52 {dimension_numbers = #tpu.dot_dimension_numbers<[1], [0], [0], [1], [0, 0, 1, 1], [], []>} : vector<16x256xf32>, vector<256x128xf32>, vector<16x128xf32> -> vector<16x128xf32>
    %65 = arith.addf %58, %64 : vector<16x128xf32>
    %c2_53 = arith.constant 2 : index
    %c0_54 = arith.constant 0 : index
    %66 = vector.load %arg2[%c2_53, %c0_54] : memref<18x128xf32, #tpu.memory_space<vmem>>, vector<16x128xf32>
    %c2_55 = arith.constant 2 : index
    %c0_56 = arith.constant 0 : index
    %67 = vector.load %arg14[%c2_55, %c0_56] : memref<18x128xf32, #tpu.memory_space<vmem>>, vector<16x128xf32>
    %68 = tpu.concatenate %66, %67 in 1 : vector<16x128xf32>, vector<16x128xf32> -> vector<16x256xf32>
    %c2_57 = arith.constant 2 : index
    %c0_58 = arith.constant 0 : index
    %c0_59 = arith.constant 0 : index
    %69 = vector.load %arg6[%c2_57, %c0_58, %c0_59] : memref<3x256x128xf32, #tpu.memory_space<vmem>>, vector<1x256x128xf32>
    %70 = vector.shape_cast %69 : vector<1x256x128xf32> to vector<256x128xf32>
    %cst_60 = arith.constant dense<0.000000e+00> : vector<16x128xf32>
    %71 = tpu.matmul %68, %70, %cst_60 {dimension_numbers = #tpu.dot_dimension_numbers<[1], [0], [0], [1], [0, 0, 1, 1], [], []>} : vector<16x256xf32>, vector<256x128xf32>, vector<16x128xf32> -> vector<16x128xf32>
    %72 = arith.addf %65, %71 : vector<16x128xf32>
    %c0_61 = arith.constant 0 : index
    %c0_62 = arith.constant 0 : index
    %73 = vector.load %arg10[%c0_61, %c0_62] : memref<4x4xf32, #tpu.memory_space<vmem>>, vector<1x4xf32>
    %c1_63 = arith.constant 1 : index
    %c0_64 = arith.constant 0 : index
    %74 = vector.load %arg10[%c1_63, %c0_64] : memref<4x4xf32, #tpu.memory_space<vmem>>, vector<1x4xf32>
    %cst_65 = arith.constant dense<0.000000e+00> : vector<128xf32>
    %75 = vector.multi_reduction <add>, %72, %cst_65 [0] : vector<16x128xf32> to vector<128xf32>
    %76 = vector.shape_cast %75 : vector<128xf32> to vector<1x128xf32>
    %77 = arith.mulf %72, %72 : vector<16x128xf32>
    %cst_66 = arith.constant dense<0.000000e+00> : vector<128xf32>
    %78 = vector.multi_reduction <add>, %77, %cst_66 [0] : vector<16x128xf32> to vector<128xf32>
    %79 = vector.shape_cast %78 : vector<128xf32> to vector<1x128xf32>
    %c0_67 = arith.constant 0 : index
    %c0_68 = arith.constant 0 : index
    %80 = vector.load %arg12[%c0_67, %c0_68] : memref<128x4xf32, #tpu.memory_space<vmem>>, vector<128x4xf32>
    %cst_69 = arith.constant dense<0.000000e+00> : vector<1x4xf32>
    %81 = tpu.matmul %76, %80, %cst_69 {dimension_numbers = #tpu.dot_dimension_numbers<[1], [0], [0], [1], [0, 0, 1, 1], [], []>} : vector<1x128xf32>, vector<128x4xf32>, vector<1x4xf32> -> vector<1x4xf32>
    %cst_70 = arith.constant 0.001953125 : f32
    %82 = vector.broadcast %cst_70 : f32 to vector<1x4xf32>
    %83 = arith.mulf %81, %82 : vector<1x4xf32>
    %c0_71 = arith.constant 0 : index
    %c0_72 = arith.constant 0 : index
    %84 = vector.load %arg12[%c0_71, %c0_72] : memref<128x4xf32, #tpu.memory_space<vmem>>, vector<128x4xf32>
    %cst_73 = arith.constant dense<0.000000e+00> : vector<1x4xf32>
    %85 = tpu.matmul %79, %84, %cst_73 {dimension_numbers = #tpu.dot_dimension_numbers<[1], [0], [0], [1], [0, 0, 1, 1], [], []>} : vector<1x128xf32>, vector<128x4xf32>, vector<1x4xf32> -> vector<1x4xf32>
    %cst_74 = arith.constant 0.001953125 : f32
    %86 = vector.broadcast %cst_74 : f32 to vector<1x4xf32>
    %87 = arith.mulf %85, %86 : vector<1x4xf32>
    %88 = arith.mulf %83, %83 : vector<1x4xf32>
    %89 = arith.subf %87, %88 : vector<1x4xf32>
    %cst_75 = arith.constant 0.000000e+00 : f32
    %90 = vector.broadcast %cst_75 : f32 to vector<1x4xf32>
    %91 = arith.maximumf %89, %90 : vector<1x4xf32>
    %cst_76 = arith.constant 9.99999974E-6 : f32
    %92 = vector.broadcast %cst_76 : f32 to vector<1x4xf32>
    %93 = arith.addf %91, %92 : vector<1x4xf32>
    %94 = math.rsqrt %93 : vector<1x4xf32>
    %95 = arith.mulf %73, %94 : vector<1x4xf32>
    %96 = arith.mulf %83, %95 : vector<1x4xf32>
    %97 = arith.subf %74, %96 : vector<1x4xf32>
    %c0_77 = arith.constant 0 : index
    %c0_78 = arith.constant 0 : index
    %98 = vector.load %arg11[%c0_77, %c0_78] : memref<4x128xf32, #tpu.memory_space<vmem>>, vector<4x128xf32>
    %cst_79 = arith.constant dense<0.000000e+00> : vector<1x128xf32>
    %99 = tpu.matmul %95, %98, %cst_79 {dimension_numbers = #tpu.dot_dimension_numbers<[1], [0], [0], [1], [0, 0, 1, 1], [], []>} : vector<1x4xf32>, vector<4x128xf32>, vector<1x128xf32> -> vector<1x128xf32>
    %c0_80 = arith.constant 0 : index
    %c0_81 = arith.constant 0 : index
    %100 = vector.load %arg11[%c0_80, %c0_81] : memref<4x128xf32, #tpu.memory_space<vmem>>, vector<4x128xf32>
    %cst_82 = arith.constant dense<0.000000e+00> : vector<1x128xf32>
    %101 = tpu.matmul %97, %100, %cst_82 {dimension_numbers = #tpu.dot_dimension_numbers<[1], [0], [0], [1], [0, 0, 1, 1], [], []>} : vector<1x4xf32>, vector<4x128xf32>, vector<1x128xf32> -> vector<1x128xf32>
    %102 = vector.broadcast %99 : vector<1x128xf32> to vector<16x128xf32>
    %103 = arith.mulf %72, %102 : vector<16x128xf32>
    %104 = vector.broadcast %101 : vector<1x128xf32> to vector<16x128xf32>
    %105 = arith.addf %103, %104 : vector<16x128xf32>
    %cst_83 = arith.constant 0.000000e+00 : f32
    %106 = vector.broadcast %cst_83 : f32 to vector<16x128xf32>
    %107 = arith.maximumf %105, %106 : vector<16x128xf32>
    %c1_84 = arith.constant 1 : index
    %c0_85 = arith.constant 0 : index
    %108 = vector.load %arg15[%c1_84, %c0_85] : memref<18x128xf32, #tpu.memory_space<vmem>>, vector<16x128xf32>
    tpu.vector_store %arg15[%c1_84, %c0_85], %107 {strides = array<i32>} : memref<18x128xf32, #tpu.memory_space<vmem>>, vector<16x128xf32>,
    %cst_86 = arith.constant 0.000000e+00 : f32
    %109 = vector.broadcast %cst_86 : f32 to vector<16x128xf32>
    %c0_87 = arith.constant 0 : index
    %c0_88 = arith.constant 0 : index
    %110 = vector.load %arg9[%c0_87, %c0_88] : memref<1x128xf32, #tpu.memory_space<vmem>>, vector<1x128xf32>
    %111 = vector.broadcast %110 : vector<1x128xf32> to vector<16x128xf32>
    %112 = arith.addf %109, %111 : vector<16x128xf32>
    %c0_89 = arith.constant 0 : index
    %c0_90 = arith.constant 0 : index
    %113 = vector.load %arg15[%c0_89, %c0_90] : memref<18x128xf32, #tpu.memory_space<vmem>>, vector<16x128xf32>
    %c0_91 = arith.constant 0 : index
    %c0_92 = arith.constant 0 : index
    %c0_93 = arith.constant 0 : index
    %114 = vector.load %arg7[%c0_91, %c0_92, %c0_93] : memref<3x128x128xf32, #tpu.memory_space<vmem>>, vector<1x128x128xf32>
    %115 = vector.shape_cast %114 : vector<1x128x128xf32> to vector<128x128xf32>
    %cst_94 = arith.constant dense<0.000000e+00> : vector<16x128xf32>
    %116 = tpu.matmul %113, %115, %cst_94 {dimension_numbers = #tpu.dot_dimension_numbers<[1], [0], [0], [1], [0, 0, 1, 1], [], []>} : vector<16x128xf32>, vector<128x128xf32>, vector<16x128xf32> -> vector<16x128xf32>
    %117 = arith.addf %112, %116 : vector<16x128xf32>
    %c1_95 = arith.constant 1 : index
    %c0_96 = arith.constant 0 : index
    %118 = vector.load %arg15[%c1_95, %c0_96] : memref<18x128xf32, #tpu.memory_space<vmem>>, vector<16x128xf32>
    %c1_97 = arith.constant 1 : index
    %c0_98 = arith.constant 0 : index
    %c0_99 = arith.constant 0 : index
    %119 = vector.load %arg7[%c1_97, %c0_98, %c0_99] : memref<3x128x128xf32, #tpu.memory_space<vmem>>, vector<1x128x128xf32>
    %120 = vector.shape_cast %119 : vector<1x128x128xf32> to vector<128x128xf32>
    %cst_100 = arith.constant dense<0.000000e+00> : vector<16x128xf32>
    %121 = tpu.matmul %118, %120, %cst_100 {dimension_numbers = #tpu.dot_dimension_numbers<[1], [0], [0], [1], [0, 0, 1, 1], [], []>} : vector<16x128xf32>, vector<128x128xf32>, vector<16x128xf32> -> vector<16x128xf32>
    %122 = arith.addf %117, %121 : vector<16x128xf32>
    %c2_101 = arith.constant 2 : index
    %c0_102 = arith.constant 0 : index
    %123 = vector.load %arg15[%c2_101, %c0_102] : memref<18x128xf32, #tpu.memory_space<vmem>>, vector<16x128xf32>
    %c2_103 = arith.constant 2 : index
    %c0_104 = arith.constant 0 : index
    %c0_105 = arith.constant 0 : index
    %124 = vector.load %arg7[%c2_103, %c0_104, %c0_105] : memref<3x128x128xf32, #tpu.memory_space<vmem>>, vector<1x128x128xf32>
    %125 = vector.shape_cast %124 : vector<1x128x128xf32> to vector<128x128xf32>
    %cst_106 = arith.constant dense<0.000000e+00> : vector<16x128xf32>
    %126 = tpu.matmul %123, %125, %cst_106 {dimension_numbers = #tpu.dot_dimension_numbers<[1], [0], [0], [1], [0, 0, 1, 1], [], []>} : vector<16x128xf32>, vector<128x128xf32>, vector<16x128xf32> -> vector<16x128xf32>
    %127 = arith.addf %122, %126 : vector<16x128xf32>
    %c2_107 = arith.constant 2 : index
    %c0_108 = arith.constant 0 : index
    %128 = vector.load %arg10[%c2_107, %c0_108] : memref<4x4xf32, #tpu.memory_space<vmem>>, vector<1x4xf32>
    %c3_109 = arith.constant 3 : index
    %c0_110 = arith.constant 0 : index
    %129 = vector.load %arg10[%c3_109, %c0_110] : memref<4x4xf32, #tpu.memory_space<vmem>>, vector<1x4xf32>
    %cst_111 = arith.constant dense<0.000000e+00> : vector<128xf32>
    %130 = vector.multi_reduction <add>, %127, %cst_111 [0] : vector<16x128xf32> to vector<128xf32>
    %131 = vector.shape_cast %130 : vector<128xf32> to vector<1x128xf32>
    %132 = arith.mulf %127, %127 : vector<16x128xf32>
    %cst_112 = arith.constant dense<0.000000e+00> : vector<128xf32>
    %133 = vector.multi_reduction <add>, %132, %cst_112 [0] : vector<16x128xf32> to vector<128xf32>
    %134 = vector.shape_cast %133 : vector<128xf32> to vector<1x128xf32>
    %c0_113 = arith.constant 0 : index
    %c0_114 = arith.constant 0 : index
    %135 = vector.load %arg12[%c0_113, %c0_114] : memref<128x4xf32, #tpu.memory_space<vmem>>, vector<128x4xf32>
    %cst_115 = arith.constant dense<0.000000e+00> : vector<1x4xf32>
    %136 = tpu.matmul %131, %135, %cst_115 {dimension_numbers = #tpu.dot_dimension_numbers<[1], [0], [0], [1], [0, 0, 1, 1], [], []>} : vector<1x128xf32>, vector<128x4xf32>, vector<1x4xf32> -> vector<1x4xf32>
    %cst_116 = arith.constant 0.001953125 : f32
    %137 = vector.broadcast %cst_116 : f32 to vector<1x4xf32>
    %138 = arith.mulf %136, %137 : vector<1x4xf32>
    %c0_117 = arith.constant 0 : index
    %c0_118 = arith.constant 0 : index
    %139 = vector.load %arg12[%c0_117, %c0_118] : memref<128x4xf32, #tpu.memory_space<vmem>>, vector<128x4xf32>
    %cst_119 = arith.constant dense<0.000000e+00> : vector<1x4xf32>
    %140 = tpu.matmul %134, %139, %cst_119 {dimension_numbers = #tpu.dot_dimension_numbers<[1], [0], [0], [1], [0, 0, 1, 1], [], []>} : vector<1x128xf32>, vector<128x4xf32>, vector<1x4xf32> -> vector<1x4xf32>
    %cst_120 = arith.constant 0.001953125 : f32
    %141 = vector.broadcast %cst_120 : f32 to vector<1x4xf32>
    %142 = arith.mulf %140, %141 : vector<1x4xf32>
    %143 = arith.mulf %138, %138 : vector<1x4xf32>
    %144 = arith.subf %142, %143 : vector<1x4xf32>
    %cst_121 = arith.constant 0.000000e+00 : f32
    %145 = vector.broadcast %cst_121 : f32 to vector<1x4xf32>
    %146 = arith.maximumf %144, %145 : vector<1x4xf32>
    %cst_122 = arith.constant 9.99999974E-6 : f32
    %147 = vector.broadcast %cst_122 : f32 to vector<1x4xf32>
    %148 = arith.addf %146, %147 : vector<1x4xf32>
    %149 = math.rsqrt %148 : vector<1x4xf32>
    %150 = arith.mulf %128, %149 : vector<1x4xf32>
    %151 = arith.mulf %138, %150 : vector<1x4xf32>
    %152 = arith.subf %129, %151 : vector<1x4xf32>
    %c0_123 = arith.constant 0 : index
    %c0_124 = arith.constant 0 : index
    %153 = vector.load %arg11[%c0_123, %c0_124] : memref<4x128xf32, #tpu.memory_space<vmem>>, vector<4x128xf32>
    %cst_125 = arith.constant dense<0.000000e+00> : vector<1x128xf32>
    %154 = tpu.matmul %150, %153, %cst_125 {dimension_numbers = #tpu.dot_dimension_numbers<[1], [0], [0], [1], [0, 0, 1, 1], [], []>} : vector<1x4xf32>, vector<4x128xf32>, vector<1x128xf32> -> vector<1x128xf32>
    %c0_126 = arith.constant 0 : index
    %c0_127 = arith.constant 0 : index
    %155 = vector.load %arg11[%c0_126, %c0_127] : memref<4x128xf32, #tpu.memory_space<vmem>>, vector<4x128xf32>
    %cst_128 = arith.constant dense<0.000000e+00> : vector<1x128xf32>
    %156 = tpu.matmul %152, %155, %cst_128 {dimension_numbers = #tpu.dot_dimension_numbers<[1], [0], [0], [1], [0, 0, 1, 1], [], []>} : vector<1x4xf32>, vector<4x128xf32>, vector<1x128xf32> -> vector<1x128xf32>
    %157 = vector.broadcast %154 : vector<1x128xf32> to vector<16x128xf32>
    %158 = arith.mulf %127, %157 : vector<16x128xf32>
    %159 = vector.broadcast %156 : vector<1x128xf32> to vector<16x128xf32>
    %160 = arith.addf %158, %159 : vector<16x128xf32>
    %cst_129 = arith.constant 0.000000e+00 : f32
    %161 = vector.broadcast %cst_129 : f32 to vector<16x128xf32>
    %162 = arith.maximumf %160, %161 : vector<16x128xf32>
    %c0_130 = arith.constant 0 : index
    %c0_131 = arith.constant 0 : index
    %163 = vector.load %arg13[%c0_130, %c0_131] : memref<16x128xf32, #tpu.memory_space<vmem>>, vector<16x128xf32>
    tpu.vector_store %arg13[%c0_130, %c0_131], %162 {strides = array<i32>} : memref<16x128xf32, #tpu.memory_space<vmem>>, vector<16x128xf32>,
    return
  }
  func.func @transform_0(%arg0: i32) -> (i32, i32) {
    %c0_i32 = arith.constant 0 : i32
    %c0_i32_0 = arith.constant 0 : i32
    %c0_i32_1 = arith.constant 0 : i32
    return %c0_i32, %c0_i32_0 : i32, i32
  }
  func.func @transform_1(%arg0: i32) -> (i32, i32) {
    %c0_i32 = arith.constant 0 : i32
    %c0_i32_0 = arith.constant 0 : i32
    %c0_i32_1 = arith.constant 0 : i32
    return %c0_i32, %c0_i32_0 : i32, i32
  }
  func.func @transform_2(%arg0: i32) -> (i32, i32) {
    %c0_i32 = arith.constant 0 : i32
    %c0_i32_0 = arith.constant 0 : i32
    %c0_i32_1 = arith.constant 0 : i32
    return %c0_i32, %c0_i32_0 : i32, i32
  }
  func.func @transform_3(%arg0: i32) -> (i32, i32) {
    %c0_i32 = arith.constant 0 : i32
    %c0_i32_0 = arith.constant 0 : i32
    %c0_i32_1 = arith.constant 0 : i32
    return %c0_i32, %c0_i32_0 : i32, i32
  }
  func.func @transform_4(%arg0: i32) -> (i32, i32) {
    %c0_i32 = arith.constant 0 : i32
    %c0_i32_0 = arith.constant 0 : i32
    %c0_i32_1 = arith.constant 0 : i32
    return %c0_i32, %c0_i32_0 : i32, i32
  }
  func.func @transform_5(%arg0: i32) -> (i32, i32, i32) {
    %c0_i32 = arith.constant 0 : i32
    %c0_i32_0 = arith.constant 0 : i32
    %c0_i32_1 = arith.constant 0 : i32
    %c0_i32_2 = arith.constant 0 : i32
    return %c0_i32, %c0_i32_0, %c0_i32_1 : i32, i32, i32
  }
  func.func @transform_6(%arg0: i32) -> (i32, i32, i32) {
    %c0_i32 = arith.constant 0 : i32
    %c0_i32_0 = arith.constant 0 : i32
    %c0_i32_1 = arith.constant 0 : i32
    %c0_i32_2 = arith.constant 0 : i32
    return %c0_i32, %c0_i32_0, %c0_i32_1 : i32, i32, i32
  }
  func.func @transform_7(%arg0: i32) -> (i32, i32) {
    %c0_i32 = arith.constant 0 : i32
    %c0_i32_0 = arith.constant 0 : i32
    %c0_i32_1 = arith.constant 0 : i32
    return %c0_i32, %c0_i32_0 : i32, i32
  }
  func.func @transform_8(%arg0: i32) -> (i32, i32) {
    %c0_i32 = arith.constant 0 : i32
    %c0_i32_0 = arith.constant 0 : i32
    %c0_i32_1 = arith.constant 0 : i32
    return %c0_i32, %c0_i32_0 : i32, i32
  }
  func.func @transform_9(%arg0: i32) -> (i32, i32) {
    %c0_i32 = arith.constant 0 : i32
    %c0_i32_0 = arith.constant 0 : i32
    %c0_i32_1 = arith.constant 0 : i32
    return %c0_i32, %c0_i32_0 : i32, i32
  }
  func.func @transform_10(%arg0: i32) -> (i32, i32) {
    %c0_i32 = arith.constant 0 : i32
    %c0_i32_0 = arith.constant 0 : i32
    %c0_i32_1 = arith.constant 0 : i32
    return %c0_i32, %c0_i32_0 : i32, i32
  }
  func.func @transform_11(%arg0: i32) -> (i32, i32) {
    %c0_i32 = arith.constant 0 : i32
    %c0_i32_0 = arith.constant 0 : i32
    %c0_i32_1 = arith.constant 0 : i32
    return %c0_i32, %c0_i32_0 : i32, i32
  }
  func.func @transform_12(%arg0: i32) -> (i32, i32) {
    %c0_i32 = arith.constant 0 : i32
    %c0_i32_0 = arith.constant 0 : i32
    %c0_i32_1 = arith.constant 0 : i32
    return %c0_i32, %c0_i32_0 : i32, i32
  }
}

</mosaic_0001>

<llo_original>
// kernel: tile.21
$region0: #{tile.21}
  #allocation0 [shape = 's32[1]{0}', space=sflag, size = 0x4, scoped, tag = 'scoped memory for tile.21']
  %s0 = inlined_call_operand.vmem [shape: f32[4], index: 0, kind: input, shape index: {}]
  %s1 = inlined_call_operand.vmem [shape: f32[32,4], index: 1, kind: output, shape index: {}]
  // Predicated region
  $region2: #{tile.21} parent=0 // pred_check
    _
  $region3: #{tile.21} parent=0 // pred_check_branch
    %3 = sbr.rel (0) target = $region5
  $region4: #{tile.21} parent=0 // pred_region
    _
  $region5: #{tile.21} parent=0 // pred_fallthru
    _
  %v4 = vld [vmem:[%s0] ss:$0 sm:$0xff]
  %5 = vst [vmem:[%s1] sm:$0xff] %v4
  %s6 = scalar_lea.vmem %s1, 8
  %7 = vst [vmem:[%s6] sm:$0xff] %v4
  %s8 = scalar_lea.vmem %s1, 16
  %9 = vst [vmem:[%s8] sm:$0xff] %v4
  %s10 = scalar_lea.vmem %s1, 24
  %11 = vst [vmem:[%s10] sm:$0xff] %v4

// kernel: tile.22
$region0: #{tile.22}
  %s0 = inlined_call_operand.vmem [shape: f32[32,4], index: 0, kind: input, shape index: {}]
  %s1 = inlined_call_operand.vmem [shape: f32[1,128], index: 1, kind: output, shape index: {}]
  $region1: #{tile.22} parent=0
    #allocation0 [shape = 'u8[4096]{0}', space=vmem, size = 0x1000, scoped, tag = 'scoped mem for output reshape']
    %v2 = vld [vmem:[%s0] sm:$0x1]
    %vm3 = vcmask 31744
    %4 = vst.msk [vmem:[#allocation0] sm:$0x1] %vm3, %v2
    %s5 = scalar_lea.vmem %s0, 31
    %v6 = vld [vmem:[%s5] sm:$0x1]
    %7 = vrot.lane.b32.xlu0 %v6, 124
    %v8 = vpop.permute.xlu0 %7
    %vm9 = vcmask 1048544
    %10 = vst.msk [vmem:[#allocation0] sm:$0x1] %vm9, %v8
    %s11 = scalar_lea.vmem %s0, 30
    %v12 = vld [vmem:[%s11] sm:$0x1]
    %13 = vrot.lane.b32.xlu0 %v12, 120
    %v14 = vpop.permute.xlu0 %13
    %vm15 = vcmask 1015744
    %16 = vst.msk [vmem:[#allocation0] sm:$0x1] %vm15, %v14
    %s17 = scalar_lea.vmem %s0, 29
    %v18 = vld [vmem:[%s17] sm:$0x1]
    %19 = vrot.lane.b32.xlu0 %v18, 116
    %v20 = vpop.permute.xlu0 %19
    %vm21 = vcmask 982944
    %22 = vst.msk [vmem:[#allocation0] sm:$0x1] %vm21, %v20
    %s23 = scalar_lea.vmem %s0, 28
    %v24 = vld [vmem:[%s23] sm:$0x1]
    %25 = vrot.lane.b32.xlu0 %v24, 112
    %v26 = vpop.permute.xlu0 %25
    %vm27 = vcmask 950144
    %28 = vst.msk [vmem:[#allocation0] sm:$0x1] %vm27, %v26
    %s29 = scalar_lea.vmem %s0, 27
    %v30 = vld [vmem:[%s29] sm:$0x1]
    %31 = vrot.lane.b32.xlu0 %v30, 108
    %v32 = vpop.permute.xlu0 %31
    %vm33 = vcmask 917344
    %34 = vst.msk [vmem:[#allocation0] sm:$0x1] %vm33, %v32
    %s35 = scalar_lea.vmem %s0, 26
    %v36 = vld [vmem:[%s35] sm:$0x1]
    %37 = vrot.lane.b32.xlu0 %v36, 104
    %v38 = vpop.permute.xlu0 %37
    %vm39 = vcmask 884544
    %40 = vst.msk [vmem:[#allocation0] sm:$0x1] %vm39, %v38
    %s41 = scalar_lea.vmem %s0, 25
    %v42 = vld [vmem:[%s41] sm:$0x1]
    %43 = vrot.lane.b32.xlu0 %v42, 100
    %v44 = vpop.permute.xlu0 %43
    %vm45 = vcmask 851744
    %46 = vst.msk [vmem:[#allocation0] sm:$0x1] %vm45, %v44
    %s47 = scalar_lea.vmem %s0, 24
    %v48 = vld [vmem:[%s47] sm:$0x1]
    %49 = vrot.lane.b32.xlu0 %v48, 96
    %v50 = vpop.permute.xlu0 %49
    %vm51 = vcmask 818944
    %52 = vst.msk [vmem:[#allocation0] sm:$0x1] %vm51, %v50
    %s53 = scalar_lea.vmem %s0, 23
    %v54 = vld [vmem:[%s53] sm:$0x1]
    %55 = vrot.lane.b32.xlu0 %v54, 92
    %v56 = vpop.permute.xlu0 %55
    %vm57 = vcmask 786144
    %58 = vst.msk [vmem:[#allocation0] sm:$0x1] %vm57, %v56
    %s59 = scalar_lea.vmem %s0, 22
    %v60 = vld [vmem:[%s59] sm:$0x1]
    %61 = vrot.lane.b32.xlu0 %v60, 88
    %v62 = vpop.permute.xlu0 %61
    %vm63 = vcmask 753344
    %64 = vst.msk [vmem:[#allocation0] sm:$0x1] %vm63, %v62
    %s65 = scalar_lea.vmem %s0, 21
    %v66 = vld [vmem:[%s65] sm:$0x1]
    %67 = vrot.lane.b32.xlu0 %v66, 84
    %v68 = vpop.permute.xlu0 %67
    %vm69 = vcmask 720544
    %70 = vst.msk [vmem:[#allocation0] sm:$0x1] %vm69, %v68
    %s71 = scalar_lea.vmem %s0, 20
    %v72 = vld [vmem:[%s71] sm:$0x1]
    %73 = vrot.lane.b32.xlu0 %v72, 80
    %v74 = vpop.permute.xlu0 %73
    %vm75 = vcmask 687744
    %76 = vst.msk [vmem:[#allocation0] sm:$0x1] %vm75, %v74
    %s77 = scalar_lea.vmem %s0, 19
    %v78 = vld [vmem:[%s77] sm:$0x1]
    %79 = vrot.lane.b32.xlu0 %v78, 76
    %v80 = vpop.permute.xlu0 %79
    %vm81 = vcmask 654944
    %82 = vst.msk [vmem:[#allocation0] sm:$0x1] %vm81, %v80
    %s83 = scalar_lea.vmem %s0, 18
    %v84 = vld [vmem:[%s83] sm:$0x1]
    %85 = vrot.lane.b32.xlu0 %v84, 72
    %v86 = vpop.permute.xlu0 %85
    %vm87 = vcmask 622144
    %88 = vst.msk [vmem:[#allocation0] sm:$0x1] %vm87, %v86
    %s89 = scalar_lea.vmem %s0, 17
    %v90 = vld [vmem:[%s89] sm:$0x1]
    %91 = vrot.lane.b32.xlu0 %v90, 68
    %v92 = vpop.permute.xlu0 %91
    %vm93 = vcmask 589344
    %94 = vst.msk [vmem:[#allocation0] sm:$0x1] %vm93, %v92
    %s95 = scalar_lea.vmem %s0, 16
    %v96 = vld [vmem:[%s95] sm:$0x1]
    %97 = vrot.lane.b32.xlu0 %v96, 64
    %v98 = vpop.permute.xlu0 %97
    %vm99 = vcmask 556544
    %100 = vst.msk [vmem:[#allocation0] sm:$0x1] %vm99, %v98
    %s101 = scalar_lea.vmem %s0, 15
    %v102 = vld [vmem:[%s101] sm:$0x1]
    %103 = vrot.lane.b32.xlu0 %v102, 60
    %v104 = vpop.permute.xlu0 %103
    %vm105 = vcmask 523744
    %106 = vst.msk [vmem:[#allocation0] sm:$0x1] %vm105, %v104
    %s107 = scalar_lea.vmem %s0, 14
    %v108 = vld [vmem:[%s107] sm:$0x1]
    %109 = vrot.lane.b32.xlu0 %v108, 56
    %v110 = vpop.permute.xlu0 %109
    %vm111 = vcmask 490944
    %112 = vst.msk [vmem:[#allocation0] sm:$0x1] %vm111, %v110
    %s113 = scalar_lea.vmem %s0, 13
    %v114 = vld [vmem:[%s113] sm:$0x1]
    %115 = vrot.lane.b32.xlu0 %v114, 52
    %v116 = vpop.permute.xlu0 %115
    %vm117 = vcmask 458144
    %118 = vst.msk [vmem:[#allocation0] sm:$0x1] %vm117, %v116
    %s119 = scalar_lea.vmem %s0, 12
    %v120 = vld [vmem:[%s119] sm:$0x1]
    %121 = vrot.lane.b32.xlu0 %v120, 48
    %v122 = vpop.permute.xlu0 %121
    %vm123 = vcmask 425344
    %124 = vst.msk [vmem:[#allocation0] sm:$0x1] %vm123, %v122
    %s125 = scalar_lea.vmem %s0, 11
    %v126 = vld [vmem:[%s125] sm:$0x1]
    %127 = vrot.lane.b32.xlu0 %v126, 44
    %v128 = vpop.permute.xlu0 %127
    %vm129 = vcmask 392544
    %130 = vst.msk [vmem:[#allocation0] sm:$0x1] %vm129, %v128
    %s131 = scalar_lea.vmem %s0, 10
    %v132 = vld [vmem:[%s131] sm:$0x1]
    %133 = vrot.lane.b32.xlu0 %v132, 40
    %v134 = vpop.permute.xlu0 %133
    %vm135 = vcmask 359744
    %136 = vst.msk [vmem:[#allocation0] sm:$0x1] %vm135, %v134
    %s137 = scalar_lea.vmem %s0, 9
    %v138 = vld [vmem:[%s137] sm:$0x1]
    %139 = vrot.lane.b32.xlu0 %v138, 36
    %v140 = vpop.permute.xlu0 %139
    %vm141 = vcmask 326944
    %142 = vst.msk [vmem:[#allocation0] sm:$0x1] %vm141, %v140
    %s143 = scalar_lea.vmem %s0, 8
    %v144 = vld [vmem:[%s143] sm:$0x1]
    %145 = vrot.lane.b32.xlu0 %v144, 32
    %v146 = vpop.permute.xlu0 %145
    %vm147 = vcmask 294144
    %148 = vst.msk [vmem:[#allocation0] sm:$0x1] %vm147, %v146
    %s149 = scalar_lea.vmem %s0, 7
    %v150 = vld [vmem:[%s149] sm:$0x1]
    %151 = vrot.lane.b32.xlu0 %v150, 28
    %v152 = vpop.permute.xlu0 %151
    %vm153 = vcmask 261344
    %154 = vst.msk [vmem:[#allocation0] sm:$0x1] %vm153, %v152
    %s155 = scalar_lea.vmem %s0, 6
    %v156 = vld [vmem:[%s155] sm:$0x1]
    %157 = vrot.lane.b32.xlu0 %v156, 24
    %v158 = vpop.permute.xlu0 %157
    %vm159 = vcmask 228544
    %160 = vst.msk [vmem:[#allocation0] sm:$0x1] %vm159, %v158
    %s161 = scalar_lea.vmem %s0, 5
    %v162 = vld [vmem:[%s161] sm:$0x1]
    %163 = vrot.lane.b32.xlu0 %v162, 20
    %v164 = vpop.permute.xlu0 %163
    %vm165 = vcmask 195744
    %166 = vst.msk [vmem:[#allocation0] sm:$0x1] %vm165, %v164
    %s167 = scalar_lea.vmem %s0, 4
    %v168 = vld [vmem:[%s167] sm:$0x1]
    %169 = vrot.lane.b32.xlu0 %v168, 16
    %v170 = vpop.permute.xlu0 %169
    %vm171 = vcmask 162944
    %172 = vst.msk [vmem:[#allocation0] sm:$0x1] %vm171, %v170
    %s173 = scalar_lea.vmem %s0, 3
    %v174 = vld [vmem:[%s173] sm:$0x1]
    %175 = vrot.lane.b32.xlu0 %v174, 12
    %v176 = vpop.permute.xlu0 %175
    %vm177 = vcmask 130144
    %178 = vst.msk [vmem:[#allocation0] sm:$0x1] %vm177, %v176
    %s179 = scalar_lea.vmem %s0, 2
    %v180 = vld [vmem:[%s179] sm:$0x1]
    %181 = vrot.lane.b32.xlu0 %v180, 8
    %v182 = vpop.permute.xlu0 %181
    %vm183 = vcmask 97344
    %184 = vst.msk [vmem:[#allocation0] sm:$0x1] %vm183, %v182
    %s185 = scalar_lea.vmem %s0, 1
    %v186 = vld [vmem:[%s185] sm:$0x1]
    %187 = vrot.lane.b32.xlu0 %v186, 4
    %v188 = vpop.permute.xlu0 %187
    %vm189 = vcmask 64544
    %190 = vst.msk [vmem:[#allocation0] sm:$0x1] %vm189, %v188
    %s192 = sshllo.u32 0, 1
    %v194 = vld [vmem:[#allocation0] sm:%s192]
    %s195 = sshllo.u32 0, 1
    %196 = vst [vmem:[%s1] sm:%s195] %v194

// kernel: up_forward.1
$region0: #{up_forward.1}
  #allocation0 [shape = 'u32[]', space=smem, size = 0x4, offset = 0x4, fixed_abs, tag = 'smem constant byte address 0x4 - core index']
  #allocation1 [shape = 'u32[144,128]{1,0:T(1,128)}', space=vmem, size = 0x12000, scoped, tag = 'internal scratch']
  #allocation2 [shape = 'f32[18,128]{1,0:T(8,128)}', space=vmem, size = 0x3000, scoped, tag = 'scratch operand']
  #allocation3 [shape = 'f32[18,128]{1,0:T(8,128)}', space=vmem, size = 0x3000, scoped, tag = 'scratch operand']
  %s0 = inlined_call_operand.vmem [shape: f32[8,128], index: 0, kind: input, shape index: {}]
  %s1 = inlined_call_operand.vmem [shape: f32[18,128], index: 1, kind: input, shape index: {}]
  %s2 = inlined_call_operand.vmem [shape: f32[128,128], index: 2, kind: input, shape index: {}]
  %s3 = inlined_call_operand.vmem [shape: f32[128,128], index: 3, kind: input, shape index: {}]
  %s4 = inlined_call_operand.vmem [shape: f32[1,128], index: 4, kind: input, shape index: {}]
  %s5 = inlined_call_operand.vmem [shape: f32[3,256,128], index: 5, kind: input, shape index: {}]
  %s6 = inlined_call_operand.vmem [shape: f32[3,128,128], index: 6, kind: input, shape index: {}]
  %s7 = inlined_call_operand.vmem [shape: f32[1,128], index: 7, kind: input, shape index: {}]
  %s8 = inlined_call_operand.vmem [shape: f32[1,128], index: 8, kind: input, shape index: {}]
  %s9 = inlined_call_operand.vmem [shape: f32[4,4], index: 9, kind: input, shape index: {}]
  %s10 = inlined_call_operand.vmem [shape: f32[4,128], index: 10, kind: input, shape index: {}]
  %s11 = inlined_call_operand.vmem [shape: f32[128,4], index: 11, kind: input, shape index: {}]
  %s12 = inlined_call_operand.vmem [shape: f32[16,128], index: 12, kind: output, shape index: {}]
  %s13 = sld [smem:[#allocation0]]
  $region58: #{up_forward.1} parent=0
    _
  %s15 = ssub.s32 1, %s13
  %s16 = scalar_select 0, %s15, %s13
  // Predicated region
  $region2: #{up_forward.1} parent=0 // pred_check
    _
  $region3: #{up_forward.1} parent=0 // pred_check_branch
    %18 = sbr.rel (0) target = $region5
  $region4: #{up_forward.1} parent=0 // pred_region
    _
  $region5: #{up_forward.1} parent=0 // pred_fallthru
    _
  // Predicated region
  $region6: #{up_forward.1} parent=0 // pred_check
    _
  $region7: #{up_forward.1} parent=0 // pred_check_branch
    %20 = sbr.rel (0) target = $region9
  $region8: #{up_forward.1} parent=0 // pred_region
    _
  $region9: #{up_forward.1} parent=0 // pred_fallthru
    _
  // Predicated region
  $region10: #{up_forward.1} parent=0 // pred_check
    _
  $region11: #{up_forward.1} parent=0 // pred_check_branch
    %22 = sbr.rel (0) target = $region13
  $region12: #{up_forward.1} parent=0 // pred_region
    _
  $region13: #{up_forward.1} parent=0 // pred_fallthru
    _
  // Predicated region
  $region14: #{up_forward.1} parent=0 // pred_check
    _
  $region15: #{up_forward.1} parent=0 // pred_check_branch
    %24 = sbr.rel (0) target = $region17
  $region16: #{up_forward.1} parent=0 // pred_region
    _
  $region17: #{up_forward.1} parent=0 // pred_fallthru
    _
  // Predicated region
  $region18: #{up_forward.1} parent=0 // pred_check
    _
  $region19: #{up_forward.1} parent=0 // pred_check_branch
    %26 = sbr.rel (0) target = $region21
  $region20: #{up_forward.1} parent=0 // pred_region
    _
  $region21: #{up_forward.1} parent=0 // pred_fallthru
    _
  // Predicated region
  $region22: #{up_forward.1} parent=0 // pred_check
    _
  $region23: #{up_forward.1} parent=0 // pred_check_branch
    %28 = sbr.rel (0) target = $region25
  $region24: #{up_forward.1} parent=0 // pred_region
    _
  $region25: #{up_forward.1} parent=0 // pred_fallthru
    _
  // Predicated region
  $region26: #{up_forward.1} parent=0 // pred_check
    _
  $region27: #{up_forward.1} parent=0 // pred_check_branch
    %30 = sbr.rel (0) target = $region29
  $region28: #{up_forward.1} parent=0 // pred_region
    _
  $region29: #{up_forward.1} parent=0 // pred_fallthru
    _
  // Predicated region
  $region30: #{up_forward.1} parent=0 // pred_check
    _
  $region31: #{up_forward.1} parent=0 // pred_check_branch
    %32 = sbr.rel (0) target = $region33
  $region32: #{up_forward.1} parent=0 // pred_region
    _
  $region33: #{up_forward.1} parent=0 // pred_fallthru
    _
  // Predicated region
  $region34: #{up_forward.1} parent=0 // pred_check
    _
  $region35: #{up_forward.1} parent=0 // pred_check_branch
    %34 = sbr.rel (0) target = $region37
  $region36: #{up_forward.1} parent=0 // pred_region
    _
  $region37: #{up_forward.1} parent=0 // pred_fallthru
    _
  // Predicated region
  $region38: #{up_forward.1} parent=0 // pred_check
    _
  $region39: #{up_forward.1} parent=0 // pred_check_branch
    %36 = sbr.rel (0) target = $region41
  $region40: #{up_forward.1} parent=0 // pred_region
    _
  $region41: #{up_forward.1} parent=0 // pred_fallthru
    _
  // Predicated region
  $region42: #{up_forward.1} parent=0 // pred_check
    _
  $region43: #{up_forward.1} parent=0 // pred_check_branch
    %38 = sbr.rel (0) target = $region45
  $region44: #{up_forward.1} parent=0 // pred_region
    _
  $region45: #{up_forward.1} parent=0 // pred_fallthru
    _
  // Predicated region
  $region46: #{up_forward.1} parent=0 // pred_check
    _
  $region47: #{up_forward.1} parent=0 // pred_check_branch
    %40 = sbr.rel (0) target = $region49
  $region48: #{up_forward.1} parent=0 // pred_region
    _
  $region49: #{up_forward.1} parent=0 // pred_fallthru
    _
  %v41 = vld [vmem:[%s4] sm:$0x1]
  %v42 = vld [vmem:[%s0] sm:$0xff]
  %v43 = vld [vmem:[%s2] sm:$0xff]
  %v44 = vld [vmem:[%s2 + $0x8] sm:$0xff]
  %v45 = vld [vmem:[%s2 + $0x10] sm:$0xff]
  %v46 = vld [vmem:[%s2 + $0x18] sm:$0xff]
  %v47 = vld [vmem:[%s2 + $0x20] sm:$0xff]
  %v48 = vld [vmem:[%s2 + $0x28] sm:$0xff]
  %v49 = vld [vmem:[%s2 + $0x30] sm:$0xff]
  %v50 = vld [vmem:[%s2 + $0x38] sm:$0xff]
  %v51 = vld [vmem:[%s2 + $0x40] sm:$0xff]
  %v52 = vld [vmem:[%s2 + $0x48] sm:$0xff]
  %v53 = vld [vmem:[%s2 + $0x50] sm:$0xff]
  %v54 = vld [vmem:[%s2 + $0x58] sm:$0xff]
  %v55 = vld [vmem:[%s2 + $0x60] sm:$0xff]
  %v56 = vld [vmem:[%s2 + $0x68] sm:$0xff]
  %v57 = vld [vmem:[%s2 + $0x70] sm:$0xff]
  %v58 = vld [vmem:[%s2 + $0x78] sm:$0xff]
  %v60 = vlaneseq
  %v61 = vshrl.u32 %v60, 7
  %v62 = vsub.s32 0, %v61
  %v63 = vrot.slane %v41, %v62
  %65 = vmatprep.subr.mxu0 0.0
  %66 = vmatpush1.msra.mxu0 %v43
  %67 = vmatprep.subr.mxu0 0.0
  %68 = vmatpush1.msra.mxu0 %v44
  %69 = vmatprep.subr.mxu0 0.0
  %70 = vmatpush1.msra.mxu0 %v45
  %71 = vmatprep.subr.mxu0 0.0
  %72 = vmatpush1.msra.mxu0 %v46
  %73 = vmatprep.subr.mxu0 0.0
  %74 = vmatpush1.msra.mxu0 %v47
  %75 = vmatprep.subr.mxu0 0.0
  %76 = vmatpush1.msra.mxu0 %v48
  %77 = vmatprep.subr.mxu0 0.0
  %78 = vmatpush1.msra.mxu0 %v49
  %79 = vmatprep.subr.mxu0 0.0
  %80 = vmatpush1.msra.mxu0 %v50
  %81 = vmatprep.subr.mxu0 0.0
  %82 = vmatpush1.msra.mxu0 %v51
  %83 = vmatprep.subr.mxu0 0.0
  %84 = vmatpush1.msra.mxu0 %v52
  %85 = vmatprep.subr.mxu0 0.0
  %86 = vmatpush1.msra.mxu0 %v53
  %87 = vmatprep.subr.mxu0 0.0
  %88 = vmatpush1.msra.mxu0 %v54
  %89 = vmatprep.subr.mxu0 0.0
  %90 = vmatpush1.msra.mxu0 %v55
  %91 = vmatprep.subr.mxu0 0.0
  %92 = vmatpush1.msra.mxu0 %v56
  %93 = vmatprep.subr.mxu0 0.0
  %94 = vmatpush1.msra.mxu0 %v57
  %95 = vmatprep.subr.mxu0 0.0
  %96 = vmatpush1.msra.mxu0 %v58
  %97 = vmatprep.subr.mxu0 0.0
  %98 = vmatpush1.msra.mxu0 0.0
  %99 = vmatprep.subr.mxu0 0.0
  %100 = vmatpush1.msra.mxu0 0.0
  %101 = vmatprep.subr.mxu0 0.0
  %102 = vmatpush1.msra.mxu0 0.0
  %103 = vmatprep.subr.mxu0 0.0
  %104 = vmatpush1.msra.mxu0 0.0
  %105 = vmatprep.subr.mxu0 0.0
  %106 = vmatpush1.msra.mxu0 0.0
  %107 = vmatprep.subr.mxu0 0.0
  %108 = vmatpush1.msra.mxu0 0.0
  %109 = vmatprep.subr.mxu0 0.0
  %110 = vmatpush1.msra.mxu0 0.0
  %111 = vmatprep.subr.mxu0 0.0
  %112 = vmatpush1.msra.mxu0 0.0
  %113 = vmatprep.subr.mxu0 0.0
  %114 = vmatpush1.msra.mxu0 0.0
  %115 = vmatprep.subr.mxu0 0.0
  %116 = vmatpush1.msra.mxu0 0.0
  %117 = vmatprep.subr.mxu0 0.0
  %118 = vmatpush1.msra.mxu0 0.0
  %119 = vmatprep.subr.mxu0 0.0
  %120 = vmatpush1.msra.mxu0 0.0
  %121 = vmatprep.subr.mxu0 0.0
  %122 = vmatpush1.msra.mxu0 0.0
  %123 = vmatprep.subr.mxu0 0.0
  %124 = vmatpush1.msra.mxu0 0.0
  %125 = vmatprep.subr.mxu0 0.0
  %126 = vmatpush1.msra.mxu0 0.0
  %127 = vmatprep.subr.mxu0 0.0
  %128 = vmatpush1.msra.mxu0 0.0
  %129 = vmatprep.mubr.f32.mxu0 0.0
  %130 = vmatmul.mubr.f32.gmra.mrb[0].mxu0 %v42
  %v131 = vpop.f32.mrb[0].mxu0
  %v132 = vadd.f32 %v63, %v131
  %v133 = vpop.f32.mrb[0].mxu0
  %134 = vdwg.mxu0
  %v135 = vld [vmem:[%s3] sm:$0xff]
  %v136 = vld [vmem:[%s3 + $0x8] sm:$0xff]
  %v137 = vld [vmem:[%s3 + $0x10] sm:$0xff]
  %v138 = vld [vmem:[%s3 + $0x18] sm:$0xff]
  %v139 = vld [vmem:[%s3 + $0x20] sm:$0xff]
  %v140 = vld [vmem:[%s3 + $0x28] sm:$0xff]
  %v141 = vld [vmem:[%s3 + $0x30] sm:$0xff]
  %v142 = vld [vmem:[%s3 + $0x38] sm:$0xff]
  %v143 = vld [vmem:[%s3 + $0x40] sm:$0xff]
  %v144 = vld [vmem:[%s3 + $0x48] sm:$0xff]
  %v145 = vld [vmem:[%s3 + $0x50] sm:$0xff]
  %v146 = vld [vmem:[%s3 + $0x58] sm:$0xff]
  %v147 = vld [vmem:[%s3 + $0x60] sm:$0xff]
  %v148 = vld [vmem:[%s3 + $0x68] sm:$0xff]
  %v149 = vld [vmem:[%s3 + $0x70] sm:$0xff]
  %v150 = vld [vmem:[%s3 + $0x78] sm:$0xff]
  %151 = vmatprep.subr.mxu0 0.0
  %152 = vmatpush1.msra.mxu0 %v135
  %153 = vmatprep.subr.mxu0 0.0
  %154 = vmatpush1.msra.mxu0 %v136
  %155 = vmatprep.subr.mxu0 0.0
  %156 = vmatpush1.msra.mxu0 %v137
  %157 = vmatprep.subr.mxu0 0.0
  %158 = vmatpush1.msra.mxu0 %v138
  %159 = vmatprep.subr.mxu0 0.0
  %160 = vmatpush1.msra.mxu0 %v139
  %161 = vmatprep.subr.mxu0 0.0
  %162 = vmatpush1.msra.mxu0 %v140
  %163 = vmatprep.subr.mxu0 0.0
  %164 = vmatpush1.msra.mxu0 %v141
  %165 = vmatprep.subr.mxu0 0.0
  %166 = vmatpush1.msra.mxu0 %v142
  %167 = vmatprep.subr.mxu0 0.0
  %168 = vmatpush1.msra.mxu0 %v143
  %169 = vmatprep.subr.mxu0 0.0
  %170 = vmatpush1.msra.mxu0 %v144
  %171 = vmatprep.subr.mxu0 0.0
  %172 = vmatpush1.msra.mxu0 %v145
  %173 = vmatprep.subr.mxu0 0.0
  %174 = vmatpush1.msra.mxu0 %v146
  %175 = vmatprep.subr.mxu0 0.0
  %176 = vmatpush1.msra.mxu0 %v147
  %177 = vmatprep.subr.mxu0 0.0
  %178 = vmatpush1.msra.mxu0 %v148
  %179 = vmatprep.subr.mxu0 0.0
  %180 = vmatpush1.msra.mxu0 %v149
  %181 = vmatprep.subr.mxu0 0.0
  %182 = vmatpush1.msra.mxu0 %v150
  %183 = vmatprep.subr.mxu0 0.0
  %184 = vmatpush1.msra.mxu0 0.0
  %185 = vmatprep.subr.mxu0 0.0
  %186 = vmatpush1.msra.mxu0 0.0
  %187 = vmatprep.subr.mxu0 0.0
  %188 = vmatpush1.msra.mxu0 0.0
  %189 = vmatprep.subr.mxu0 0.0
  %190 = vmatpush1.msra.mxu0 0.0
  %191 = vmatprep.subr.mxu0 0.0
  %192 = vmatpush1.msra.mxu0 0.0
  %193 = vmatprep.subr.mxu0 0.0
  %194 = vmatpush1.msra.mxu0 0.0
  %195 = vmatprep.subr.mxu0 0.0
  %196 = vmatpush1.msra.mxu0 0.0
  %197 = vmatprep.subr.mxu0 0.0
  %198 = vmatpush1.msra.mxu0 0.0
  %199 = vmatprep.subr.mxu0 0.0
  %200 = vmatpush1.msra.mxu0 0.0
  %201 = vmatprep.subr.mxu0 0.0
  %202 = vmatpush1.msra.mxu0 0.0
  %203 = vmatprep.subr.mxu0 0.0
  %204 = vmatpush1.msra.mxu0 0.0
  %205 = vmatprep.subr.mxu0 0.0
  %206 = vmatpush1.msra.mxu0 0.0
  %207 = vmatprep.subr.mxu0 0.0
  %208 = vmatpush1.msra.mxu0 0.0
  %209 = vmatprep.subr.mxu0 0.0
  %210 = vmatpush1.msra.mxu0 0.0
  %211 = vmatprep.subr.mxu0 0.0
  %212 = vmatpush1.msra.mxu0 0.0
  %213 = vmatprep.subr.mxu0 0.0
  %214 = vmatpush1.msra.mxu0 0.0
  %215 = vmatprep.mubr.f32.mxu0 0.0
  %216 = vmatmul.mubr.f32.gmra.mrb[0].mxu0 %v42
  %v217 = vpop.f32.mrb[0].mxu0
  %v218 = vadd.f32 %v63, %v217
  %v219 = vpop.f32.mrb[0].mxu0
  %220 = vdwg.mxu0
  %221 = vst [vmem:[#allocation2] sm:$0x1] 0.0
  %222 = vst [vmem:[#allocation2 + $0x11] sm:$0x1] 0.0
  %223 = vst [vmem:[#allocation3] sm:$0x1] 0.0
  %224 = vst [vmem:[#allocation3 + $0x11] sm:$0x1] 0.0
  %225 = vst [vmem:[#allocation2 + $0x1] sm:$0x1] %v132
  %226 = vst [vmem:[#allocation2 + $0x2] sm:$0x1] %v218
  %227 = vst [vmem:[#allocation2 + $0x2] sm:$0x2] %v132
  %228 = vst [vmem:[#allocation2 + $0x3] sm:$0x2] %v218
  %229 = vst [vmem:[#allocation2 + $0x3] sm:$0x4] %v132
  %230 = vst [vmem:[#allocation2 + $0x4] sm:$0x4] %v218
  %231 = vst [vmem:[#allocation2 + $0x4] sm:$0x8] %v132
  %232 = vst [vmem:[#allocation2 + $0x5] sm:$0x8] %v218
  %233 = vst [vmem:[#allocation2 + $0x5] sm:$0x10] %v132
  %234 = vst [vmem:[#allocation2 + $0x6] sm:$0x10] %v218
  %235 = vst [vmem:[#allocation2 + $0x6] sm:$0x20] %v132
  %236 = vst [vmem:[#allocation2 + $0x7] sm:$0x20] %v218
  %237 = vst [vmem:[#allocation2 + $0x7] sm:$0x40] %v132
  %238 = vst [vmem:[#allocation2 + $0x8] sm:$0x40] %v218
  %239 = vst [vmem:[#allocation2 + $0x8] sm:$0x80] %v132
  %240 = vst [vmem:[#allocation2 + $0x9] sm:$0x80] %v218
  %v241 = vld [vmem:[%s7] sm:$0x1]
  %v243 = vlaneseq
  %v244 = vshrl.u32 %v243, 7
  %v245 = vsub.s32 0, %v244
  %v246 = vrot.slane %v241, %v245
  %v248 = vadd.f32 %v246, 0.0
  %v249 = vld [vmem:[%s1] sm:$0xff]
  %v250 = vld [vmem:[%s1 + $0x8] sm:$0xff]
  %v251 = vld [vmem:[#allocation2] sm:$0xff]
  %v252 = vld [vmem:[#allocation2 + $0x8] sm:$0xff]
  %v253 = vld [vmem:[%s5] sm:$0xff]
  %v254 = vld [vmem:[%s5 + $0x8] sm:$0xff]
  %v255 = vld [vmem:[%s5 + $0x10] sm:$0xff]
  %v256 = vld [vmem:[%s5 + $0x18] sm:$0xff]
  %v257 = vld [vmem:[%s5 + $0x20] sm:$0xff]
  %v258 = vld [vmem:[%s5 + $0x28] sm:$0xff]
  %v259 = vld [vmem:[%s5 + $0x30] sm:$0xff]
  %v260 = vld [vmem:[%s5 + $0x38] sm:$0xff]
  %v261 = vld [vmem:[%s5 + $0x40] sm:$0xff]
  %v262 = vld [vmem:[%s5 + $0x48] sm:$0xff]
  %v263 = vld [vmem:[%s5 + $0x50] sm:$0xff]
  %v264 = vld [vmem:[%s5 + $0x58] sm:$0xff]
  %v265 = vld [vmem:[%s5 + $0x60] sm:$0xff]
  %v266 = vld [vmem:[%s5 + $0x68] sm:$0xff]
  %v267 = vld [vmem:[%s5 + $0x70] sm:$0xff]
  %v268 = vld [vmem:[%s5 + $0x78] sm:$0xff]
  %v269 = vld [vmem:[%s5 + $0x80] sm:$0xff]
  %v270 = vld [vmem:[%s5 + $0x88] sm:$0xff]
  %v271 = vld [vmem:[%s5 + $0x90] sm:$0xff]
  %v272 = vld [vmem:[%s5 + $0x98] sm:$0xff]
  %v273 = vld [vmem:[%s5 + $0xa0] sm:$0xff]
  %v274 = vld [vmem:[%s5 + $0xa8] sm:$0xff]
  %v275 = vld [vmem:[%s5 + $0xb0] sm:$0xff]
  %v276 = vld [vmem:[%s5 + $0xb8] sm:$0xff]
  %v277 = vld [vmem:[%s5 + $0xc0] sm:$0xff]
  %v278 = vld [vmem:[%s5 + $0xc8] sm:$0xff]
  %v279 = vld [vmem:[%s5 + $0xd0] sm:$0xff]
  %v280 = vld [vmem:[%s5 + $0xd8] sm:$0xff]
  %v281 = vld [vmem:[%s5 + $0xe0] sm:$0xff]
  %v282 = vld [vmem:[%s5 + $0xe8] sm:$0xff]
  %v283 = vld [vmem:[%s5 + $0xf0] sm:$0xff]
  %v284 = vld [vmem:[%s5 + $0xf8] sm:$0xff]
  %285 = vmatprep.subr.mxu0 0.0
  %286 = vmatpush1.msra.mxu0 %v253
  %287 = vmatprep.subr.mxu0 0.0
  %288 = vmatpush1.msra.mxu0 %v254
  %289 = vmatprep.subr.mxu0 0.0
  %290 = vmatpush1.msra.mxu0 %v255
  %291 = vmatprep.subr.mxu0 0.0
  %292 = vmatpush1.msra.mxu0 %v256
  %293 = vmatprep.subr.mxu0 0.0
  %294 = vmatpush1.msra.mxu0 %v257
  %295 = vmatprep.subr.mxu0 0.0
  %296 = vmatpush1.msra.mxu0 %v258
  %297 = vmatprep.subr.mxu0 0.0
  %298 = vmatpush1.msra.mxu0 %v259
  %299 = vmatprep.subr.mxu0 0.0
  %300 = vmatpush1.msra.mxu0 %v260
  %301 = vmatprep.subr.mxu0 0.0
  %302 = vmatpush1.msra.mxu0 %v261
  %303 = vmatprep.subr.mxu0 0.0
  %304 = vmatpush1.msra.mxu0 %v262
  %305 = vmatprep.subr.mxu0 0.0
  %306 = vmatpush1.msra.mxu0 %v263
  %307 = vmatprep.subr.mxu0 0.0
  %308 = vmatpush1.msra.mxu0 %v264
  %309 = vmatprep.subr.mxu0 0.0
  %310 = vmatpush1.msra.mxu0 %v265
  %311 = vmatprep.subr.mxu0 0.0
  %312 = vmatpush1.msra.mxu0 %v266
  %313 = vmatprep.subr.mxu0 0.0
  %314 = vmatpush1.msra.mxu0 %v267
  %315 = vmatprep.subr.mxu0 0.0
  %316 = vmatpush1.msra.mxu0 %v268
  %317 = vmatprep.subr.mxu0 0.0
  %318 = vmatpush1.msra.mxu0 %v269
  %319 = vmatprep.subr.mxu0 0.0
  %320 = vmatpush1.msra.mxu0 %v270
  %321 = vmatprep.subr.mxu0 0.0
  %322 = vmatpush1.msra.mxu0 %v271
  %323 = vmatprep.subr.mxu0 0.0
  %324 = vmatpush1.msra.mxu0 %v272
  %325 = vmatprep.subr.mxu0 0.0
  %326 = vmatpush1.msra.mxu0 %v273
  %327 = vmatprep.subr.mxu0 0.0
  %328 = vmatpush1.msra.mxu0 %v274
  %329 = vmatprep.subr.mxu0 0.0
  %330 = vmatpush1.msra.mxu0 %v275
  %331 = vmatprep.subr.mxu0 0.0
  %332 = vmatpush1.msra.mxu0 %v276
  %333 = vmatprep.subr.mxu0 0.0
  %334 = vmatpush1.msra.mxu0 %v277
  %335 = vmatprep.subr.mxu0 0.0
  %336 = vmatpush1.msra.mxu0 %v278
  %337 = vmatprep.subr.mxu0 0.0
  %338 = vmatpush1.msra.mxu0 %v279
  %339 = vmatprep.subr.mxu0 0.0
  %340 = vmatpush1.msra.mxu0 %v280
  %341 = vmatprep.subr.mxu0 0.0
  %342 = vmatpush1.msra.mxu0 %v281
  %343 = vmatprep.subr.mxu0 0.0
  %344 = vmatpush1.msra.mxu0 %v282
  %345 = vmatprep.subr.mxu0 0.0
  %346 = vmatpush1.msra.mxu0 %v283
  %347 = vmatprep.subr.mxu0 0.0
  %348 = vmatpush1.msra.mxu0 %v284
  %349 = vmatprep.mubr.f32.mxu0 %v251
  %350 = vmatmul.mubr.f32.gmra.mrb[0].mxu0 %v249
  %v351 = vpop.f32.mrb[0].mxu0
  %v352 = vadd.f32 0.0, %v351
  %v353 = vpop.f32.mrb[0].mxu0
  %354 = vmatprep.mubr.f32.mxu0 %v252
  %355 = vmatmul.mubr.f32.gmra.mrb[0].mxu0 %v250
  %v356 = vpop.f32.mrb[0].mxu0
  %v357 = vadd.f32 0.0, %v356
  %v358 = vpop.f32.mrb[0].mxu0
  %359 = vdwg.mxu0
  %v360 = vadd.f32 %v248, %v352
  %v361 = vadd.f32 %v248, %v357
  %v362 = vld [vmem:[%s1 + $0x1] sm:$0xff]
  %v363 = vld [vmem:[%s1 + $0x9] sm:$0xff]
  %v364 = vld [vmem:[#allocation2 + $0x1] sm:$0xff]
  %v365 = vld [vmem:[#allocation2 + $0x9] sm:$0xff]
  %s366 = scalar_lea.vmem %s5, 256
  %v367 = vld [vmem:[%s366] sm:$0xff]
  %v368 = vld [vmem:[%s366 + $0x8] sm:$0xff]
  %v369 = vld [vmem:[%s366 + $0x10] sm:$0xff]
  %v370 = vld [vmem:[%s366 + $0x18] sm:$0xff]
  %v371 = vld [vmem:[%s366 + $0x20] sm:$0xff]
  %v372 = vld [vmem:[%s366 + $0x28] sm:$0xff]
  %v373 = vld [vmem:[%s366 + $0x30] sm:$0xff]
  %v374 = vld [vmem:[%s366 + $0x38] sm:$0xff]
  %v375 = vld [vmem:[%s366 + $0x40] sm:$0xff]
  %v376 = vld [vmem:[%s366 + $0x48] sm:$0xff]
  %v377 = vld [vmem:[%s366 + $0x50] sm:$0xff]
  %v378 = vld [vmem:[%s366 + $0x58] sm:$0xff]
  %v379 = vld [vmem:[%s366 + $0x60] sm:$0xff]
  %v380 = vld [vmem:[%s366 + $0x68] sm:$0xff]
  %v381 = vld [vmem:[%s366 + $0x70] sm:$0xff]
  %v382 = vld [vmem:[%s366 + $0x78] sm:$0xff]
  %v383 = vld [vmem:[%s366 + $0x80] sm:$0xff]
  %v384 = vld [vmem:[%s366 + $0x88] sm:$0xff]
  %v385 = vld [vmem:[%s366 + $0x90] sm:$0xff]
  %v386 = vld [vmem:[%s366 + $0x98] sm:$0xff]
  %v387 = vld [vmem:[%s366 + $0xa0] sm:$0xff]
  %v388 = vld [vmem:[%s366 + $0xa8] sm:$0xff]
  %v389 = vld [vmem:[%s366 + $0xb0] sm:$0xff]
  %v390 = vld [vmem:[%s366 + $0xb8] sm:$0xff]
  %v391 = vld [vmem:[%s366 + $0xc0] sm:$0xff]
  %v392 = vld [vmem:[%s366 + $0xc8] sm:$0xff]
  %v393 = vld [vmem:[%s366 + $0xd0] sm:$0xff]
  %v394 = vld [vmem:[%s366 + $0xd8] sm:$0xff]
  %v395 = vld [vmem:[%s366 + $0xe0] sm:$0xff]
  %v396 = vld [vmem:[%s366 + $0xe8] sm:$0xff]
  %v397 = vld [vmem:[%s366 + $0xf0] sm:$0xff]
  %v398 = vld [vmem:[%s366 + $0xf8] sm:$0xff]
  %399 = vmatprep.subr.mxu0 0.0
  %400 = vmatpush1.msra.mxu0 %v367
  %401 = vmatprep.subr.mxu0 0.0
  %402 = vmatpush1.msra.mxu0 %v368
  %403 = vmatprep.subr.mxu0 0.0
  %404 = vmatpush1.msra.mxu0 %v369
  %405 = vmatprep.subr.mxu0 0.0
  %406 = vmatpush1.msra.mxu0 %v370
  %407 = vmatprep.subr.mxu0 0.0
  %408 = vmatpush1.msra.mxu0 %v371
  %409 = vmatprep.subr.mxu0 0.0
  %410 = vmatpush1.msra.mxu0 %v372
  %411 = vmatprep.subr.mxu0 0.0
  %412 = vmatpush1.msra.mxu0 %v373
  %413 = vmatprep.subr.mxu0 0.0
  %414 = vmatpush1.msra.mxu0 %v374
  %415 = vmatprep.subr.mxu0 0.0
  %416 = vmatpush1.msra.mxu0 %v375
  %417 = vmatprep.subr.mxu0 0.0
  %418 = vmatpush1.msra.mxu0 %v376
  %419 = vmatprep.subr.mxu0 0.0
  %420 = vmatpush1.msra.mxu0 %v377
  %421 = vmatprep.subr.mxu0 0.0
  %422 = vmatpush1.msra.mxu0 %v378
  %423 = vmatprep.subr.mxu0 0.0
  %424 = vmatpush1.msra.mxu0 %v379
  %425 = vmatprep.subr.mxu0 0.0
  %426 = vmatpush1.msra.mxu0 %v380
  %427 = vmatprep.subr.mxu0 0.0
  %428 = vmatpush1.msra.mxu0 %v381
  %429 = vmatprep.subr.mxu0 0.0
  %430 = vmatpush1.msra.mxu0 %v382
  %431 = vmatprep.subr.mxu0 0.0
  %432 = vmatpush1.msra.mxu0 %v383
  %433 = vmatprep.subr.mxu0 0.0
  %434 = vmatpush1.msra.mxu0 %v384
  %435 = vmatprep.subr.mxu0 0.0
  %436 = vmatpush1.msra.mxu0 %v385
  %437 = vmatprep.subr.mxu0 0.0
  %438 = vmatpush1.msra.mxu0 %v386
  %439 = vmatprep.subr.mxu0 0.0
  %440 = vmatpush1.msra.mxu0 %v387
  %441 = vmatprep.subr.mxu0 0.0
  %442 = vmatpush1.msra.mxu0 %v388
  %443 = vmatprep.subr.mxu0 0.0
  %444 = vmatpush1.msra.mxu0 %v389
  %445 = vmatprep.subr.mxu0 0.0
  %446 = vmatpush1.msra.mxu0 %v390
  %447 = vmatprep.subr.mxu0 0.0
  %448 = vmatpush1.msra.mxu0 %v391
  %449 = vmatprep.subr.mxu0 0.0
  %450 = vmatpush1.msra.mxu0 %v392
  %451 = vmatprep.subr.mxu0 0.0
  %452 = vmatpush1.msra.mxu0 %v393
  %453 = vmatprep.subr.mxu0 0.0
  %454 = vmatpush1.msra.mxu0 %v394
  %455 = vmatprep.subr.mxu0 0.0
  %456 = vmatpush1.msra.mxu0 %v395
  %457 = vmatprep.subr.mxu0 0.0
  %458 = vmatpush1.msra.mxu0 %v396
  %459 = vmatprep.subr.mxu0 0.0
  %460 = vmatpush1.msra.mxu0 %v397
  %461 = vmatprep.subr.mxu0 0.0
  %462 = vmatpush1.msra.mxu0 %v398
  %463 = vmatprep.mubr.f32.mxu0 %v364
  %464 = vmatmul.mubr.f32.gmra.mrb[0].mxu0 %v362
  %v465 = vpop.f32.mrb[0].mxu0
  %v466 = vadd.f32 0.0, %v465
  %v467 = vpop.f32.mrb[0].mxu0
  %468 = vmatprep.mubr.f32.mxu0 %v365
  %469 = vmatmul.mubr.f32.gmra.mrb[0].mxu0 %v363
  %v470 = vpop.f32.mrb[0].mxu0
  %v471 = vadd.f32 0.0, %v470
  %v472 = vpop.f32.mrb[0].mxu0
  %473 = vdwg.mxu0
  %v474 = vadd.f32 %v360, %v466
  %v475 = vadd.f32 %v361, %v471
  %v476 = vld [vmem:[%s1 + $0x2] sm:$0xff]
  %v477 = vld [vmem:[%s1 + $0xa] sm:$0xff]
  %v478 = vld [vmem:[#allocation2 + $0x2] sm:$0xff]
  %v479 = vld [vmem:[#allocation2 + $0xa] sm:$0xff]
  %s480 = scalar_lea.vmem %s5, 512
  %v481 = vld [vmem:[%s480] sm:$0xff]
  %v482 = vld [vmem:[%s480 + $0x8] sm:$0xff]
  %v483 = vld [vmem:[%s480 + $0x10] sm:$0xff]
  %v484 = vld [vmem:[%s480 + $0x18] sm:$0xff]
  %v485 = vld [vmem:[%s480 + $0x20] sm:$0xff]
  %v486 = vld [vmem:[%s480 + $0x28] sm:$0xff]
  %v487 = vld [vmem:[%s480 + $0x30] sm:$0xff]
  %v488 = vld [vmem:[%s480 + $0x38] sm:$0xff]
  %v489 = vld [vmem:[%s480 + $0x40] sm:$0xff]
  %v490 = vld [vmem:[%s480 + $0x48] sm:$0xff]
  %v491 = vld [vmem:[%s480 + $0x50] sm:$0xff]
  %v492 = vld [vmem:[%s480 + $0x58] sm:$0xff]
  %v493 = vld [vmem:[%s480 + $0x60] sm:$0xff]
  %v494 = vld [vmem:[%s480 + $0x68] sm:$0xff]
  %v495 = vld [vmem:[%s480 + $0x70] sm:$0xff]
  %v496 = vld [vmem:[%s480 + $0x78] sm:$0xff]
  %v497 = vld [vmem:[%s480 + $0x80] sm:$0xff]
  %v498 = vld [vmem:[%s480 + $0x88] sm:$0xff]
  %v499 = vld [vmem:[%s480 + $0x90] sm:$0xff]
  %v500 = vld [vmem:[%s480 + $0x98] sm:$0xff]
  %v501 = vld [vmem:[%s480 + $0xa0] sm:$0xff]
  %v502 = vld [vmem:[%s480 + $0xa8] sm:$0xff]
  %v503 = vld [vmem:[%s480 + $0xb0] sm:$0xff]
  %v504 = vld [vmem:[%s480 + $0xb8] sm:$0xff]
  %v505 = vld [vmem:[%s480 + $0xc0] sm:$0xff]
  %v506 = vld [vmem:[%s480 + $0xc8] sm:$0xff]
  %v507 = vld [vmem:[%s480 + $0xd0] sm:$0xff]
  %v508 = vld [vmem:[%s480 + $0xd8] sm:$0xff]
  %v509 = vld [vmem:[%s480 + $0xe0] sm:$0xff]
  %v510 = vld [vmem:[%s480 + $0xe8] sm:$0xff]
  %v511 = vld [vmem:[%s480 + $0xf0] sm:$0xff]
  %v512 = vld [vmem:[%s480 + $0xf8] sm:$0xff]
  %513 = vmatprep.subr.mxu0 0.0
  %514 = vmatpush1.msra.mxu0 %v481
  %515 = vmatprep.subr.mxu0 0.0
  %516 = vmatpush1.msra.mxu0 %v482
  %517 = vmatprep.subr.mxu0 0.0
  %518 = vmatpush1.msra.mxu0 %v483
  %519 = vmatprep.subr.mxu0 0.0
  %520 = vmatpush1.msra.mxu0 %v484
  %521 = vmatprep.subr.mxu0 0.0
  %522 = vmatpush1.msra.mxu0 %v485
  %523 = vmatprep.subr.mxu0 0.0
  %524 = vmatpush1.msra.mxu0 %v486
  %525 = vmatprep.subr.mxu0 0.0
  %526 = vmatpush1.msra.mxu0 %v487
  %527 = vmatprep.subr.mxu0 0.0
  %528 = vmatpush1.msra.mxu0 %v488
  %529 = vmatprep.subr.mxu0 0.0
  %530 = vmatpush1.msra.mxu0 %v489
  %531 = vmatprep.subr.mxu0 0.0
  %532 = vmatpush1.msra.mxu0 %v490
  %533 = vmatprep.subr.mxu0 0.0
  %534 = vmatpush1.msra.mxu0 %v491
  %535 = vmatprep.subr.mxu0 0.0
  %536 = vmatpush1.msra.mxu0 %v492
  %537 = vmatprep.subr.mxu0 0.0
  %538 = vmatpush1.msra.mxu0 %v493
  %539 = vmatprep.subr.mxu0 0.0
  %540 = vmatpush1.msra.mxu0 %v494
  %541 = vmatprep.subr.mxu0 0.0
  %542 = vmatpush1.msra.mxu0 %v495
  %543 = vmatprep.subr.mxu0 0.0
  %544 = vmatpush1.msra.mxu0 %v496
  %545 = vmatprep.subr.mxu0 0.0
  %546 = vmatpush1.msra.mxu0 %v497
  %547 = vmatprep.subr.mxu0 0.0
  %548 = vmatpush1.msra.mxu0 %v498
  %549 = vmatprep.subr.mxu0 0.0
  %550 = vmatpush1.msra.mxu0 %v499
  %551 = vmatprep.subr.mxu0 0.0
  %552 = vmatpush1.msra.mxu0 %v500
  %553 = vmatprep.subr.mxu0 0.0
  %554 = vmatpush1.msra.mxu0 %v501
  %555 = vmatprep.subr.mxu0 0.0
  %556 = vmatpush1.msra.mxu0 %v502
  %557 = vmatprep.subr.mxu0 0.0
  %558 = vmatpush1.msra.mxu0 %v503
  %559 = vmatprep.subr.mxu0 0.0
  %560 = vmatpush1.msra.mxu0 %v504
  %561 = vmatprep.subr.mxu0 0.0
  %562 = vmatpush1.msra.mxu0 %v505
  %563 = vmatprep.subr.mxu0 0.0
  %564 = vmatpush1.msra.mxu0 %v506
  %565 = vmatprep.subr.mxu0 0.0
  %566 = vmatpush1.msra.mxu0 %v507
  %567 = vmatprep.subr.mxu0 0.0
  %568 = vmatpush1.msra.mxu0 %v508
  %569 = vmatprep.subr.mxu0 0.0
  %570 = vmatpush1.msra.mxu0 %v509
  %571 = vmatprep.subr.mxu0 0.0
  %572 = vmatpush1.msra.mxu0 %v510
  %573 = vmatprep.subr.mxu0 0.0
  %574 = vmatpush1.msra.mxu0 %v511
  %575 = vmatprep.subr.mxu0 0.0
  %576 = vmatpush1.msra.mxu0 %v512
  %577 = vmatprep.mubr.f32.mxu0 %v478
  %578 = vmatmul.mubr.f32.gmra.mrb[0].mxu0 %v476
  %v579 = vpop.f32.mrb[0].mxu0
  %v580 = vadd.f32 0.0, %v579
  %v581 = vpop.f32.mrb[0].mxu0
  %582 = vmatprep.mubr.f32.mxu0 %v479
  %583 = vmatmul.mubr.f32.gmra.mrb[0].mxu0 %v477
  %v584 = vpop.f32.mrb[0].mxu0
  %v585 = vadd.f32 0.0, %v584
  %v586 = vpop.f32.mrb[0].mxu0
  %587 = vdwg.mxu0
  %v588 = vadd.f32 %v474, %v580
  %v589 = vadd.f32 %v475, %v585
  %v590 = vld [vmem:[%s9] sm:$0x1]
  %v591 = vld [vmem:[%s9 + $0x1] sm:$0x1]
  %v592 = vadd.f32 %v588, %v589
  %v593 = vrot.slane %v592, 4
  %v594 = vadd.f32 %v592, %v593
  %v595 = vrot.slane %v594, 2
  %v596 = vadd.f32 %v594, %v595
  %v597 = vrot.slane %v596, 1
  %v598 = vadd.f32 %v596, %v597
  %v599 = vmul.f32 %v588, %v588
  %v600 = vmul.f32 %v589, %v589
  %v601 = vadd.f32 %v599, %v600
  %v602 = vrot.slane %v601, 4
  %v603 = vadd.f32 %v601, %v602
  %v604 = vrot.slane %v603, 2
  %v605 = vadd.f32 %v603, %v604
  %v606 = vrot.slane %v605, 1
  %v607 = vadd.f32 %v605, %v606
  %v608 = vld [vmem:[%s11] sm:$0xff]
  %v609 = vld [vmem:[%s11 + $0x8] sm:$0xff]
  %v610 = vld [vmem:[%s11 + $0x10] sm:$0xff]
  %v611 = vld [vmem:[%s11 + $0x18] sm:$0xff]
  %v612 = vld [vmem:[%s11 + $0x20] sm:$0xff]
  %v613 = vld [vmem:[%s11 + $0x28] sm:$0xff]
  %v614 = vld [vmem:[%s11 + $0x30] sm:$0xff]
  %v615 = vld [vmem:[%s11 + $0x38] sm:$0xff]
  %v616 = vld [vmem:[%s11 + $0x40] sm:$0xff]
  %v617 = vld [vmem:[%s11 + $0x48] sm:$0xff]
  %v618 = vld [vmem:[%s11 + $0x50] sm:$0xff]
  %v619 = vld [vmem:[%s11 + $0x58] sm:$0xff]
  %v620 = vld [vmem:[%s11 + $0x60] sm:$0xff]
  %v621 = vld [vmem:[%s11 + $0x68] sm:$0xff]
  %v622 = vld [vmem:[%s11 + $0x70] sm:$0xff]
  %v623 = vld [vmem:[%s11 + $0x78] sm:$0xff]
  %624 = vmatprep.subr.mxu0 0.0
  %625 = vmatpush1.msra.mxu0 %v608
  %626 = vmatprep.subr.mxu0 0.0
  %627 = vmatpush1.msra.mxu0 %v609
  %628 = vmatprep.subr.mxu0 0.0
  %629 = vmatpush1.msra.mxu0 %v610
  %630 = vmatprep.subr.mxu0 0.0
  %631 = vmatpush1.msra.mxu0 %v611
  %632 = vmatprep.subr.mxu0 0.0
  %633 = vmatpush1.msra.mxu0 %v612
  %634 = vmatprep.subr.mxu0 0.0
  %635 = vmatpush1.msra.mxu0 %v613
  %636 = vmatprep.subr.mxu0 0.0
  %637 = vmatpush1.msra.mxu0 %v614
  %638 = vmatprep.subr.mxu0 0.0
  %639 = vmatpush1.msra.mxu0 %v615
  %640 = vmatprep.subr.mxu0 0.0
  %641 = vmatpush1.msra.mxu0 %v616
  %642 = vmatprep.subr.mxu0 0.0
  %643 = vmatpush1.msra.mxu0 %v617
  %644 = vmatprep.subr.mxu0 0.0
  %645 = vmatpush1.msra.mxu0 %v618
  %646 = vmatprep.subr.mxu0 0.0
  %647 = vmatpush1.msra.mxu0 %v619
  %648 = vmatprep.subr.mxu0 0.0
  %649 = vmatpush1.msra.mxu0 %v620
  %650 = vmatprep.subr.mxu0 0.0
  %651 = vmatpush1.msra.mxu0 %v621
  %652 = vmatprep.subr.mxu0 0.0
  %653 = vmatpush1.msra.mxu0 %v622
  %654 = vmatprep.subr.mxu0 0.0
  %655 = vmatpush1.msra.mxu0 %v623
  %656 = vmatprep.subr.mxu0 0.0
  %657 = vmatpush1.msra.mxu0 0.0
  %658 = vmatprep.subr.mxu0 0.0
  %659 = vmatpush1.msra.mxu0 0.0
  %660 = vmatprep.subr.mxu0 0.0
  %661 = vmatpush1.msra.mxu0 0.0
  %662 = vmatprep.subr.mxu0 0.0
  %663 = vmatpush1.msra.mxu0 0.0
  %664 = vmatprep.subr.mxu0 0.0
  %665 = vmatpush1.msra.mxu0 0.0
  %666 = vmatprep.subr.mxu0 0.0
  %667 = vmatpush1.msra.mxu0 0.0
  %668 = vmatprep.subr.mxu0 0.0
  %669 = vmatpush1.msra.mxu0 0.0
  %670 = vmatprep.subr.mxu0 0.0
  %671 = vmatpush1.msra.mxu0 0.0
  %672 = vmatprep.subr.mxu0 0.0
  %673 = vmatpush1.msra.mxu0 0.0
  %674 = vmatprep.subr.mxu0 0.0
  %675 = vmatpush1.msra.mxu0 0.0
  %676 = vmatprep.subr.mxu0 0.0
  %677 = vmatpush1.msra.mxu0 0.0
  %678 = vmatprep.subr.mxu0 0.0
  %679 = vmatpush1.msra.mxu0 0.0
  %680 = vmatprep.subr.mxu0 0.0
  %681 = vmatpush1.msra.mxu0 0.0
  %682 = vmatprep.subr.mxu0 0.0
  %683 = vmatpush1.msra.mxu0 0.0
  %684 = vmatprep.subr.mxu0 0.0
  %685 = vmatpush1.msra.mxu0 0.0
  %686 = vmatprep.subr.mxu0 0.0
  %687 = vmatpush1.msra.mxu0 0.0
  %688 = vmatprep.mubr.f32.mxu0 0.0
  %689 = vmatmul.mubr.f32.gmra.mrb[0].mxu0 %v598
  %v690 = vpop.f32.mrb[0].mxu0
  %v691 = vadd.f32 0.0, %v690
  %v692 = vpop.f32.mrb[0].mxu0
  %693 = vdwg.mxu0
  %v694 = vmul.f32 %v691, 0.001953125
  %695 = vmatprep.subr.mxu0 0.0
  %696 = vmatpush1.msra.mxu0 %v608
  %697 = vmatprep.subr.mxu0 0.0
  %698 = vmatpush1.msra.mxu0 %v609
  %699 = vmatprep.subr.mxu0 0.0
  %700 = vmatpush1.msra.mxu0 %v610
  %701 = vmatprep.subr.mxu0 0.0
  %702 = vmatpush1.msra.mxu0 %v611
  %703 = vmatprep.subr.mxu0 0.0
  %704 = vmatpush1.msra.mxu0 %v612
  %705 = vmatprep.subr.mxu0 0.0
  %706 = vmatpush1.msra.mxu0 %v613
  %707 = vmatprep.subr.mxu0 0.0
  %708 = vmatpush1.msra.mxu0 %v614
  %709 = vmatprep.subr.mxu0 0.0
  %710 = vmatpush1.msra.mxu0 %v615
  %711 = vmatprep.subr.mxu0 0.0
  %712 = vmatpush1.msra.mxu0 %v616
  %713 = vmatprep.subr.mxu0 0.0
  %714 = vmatpush1.msra.mxu0 %v617
  %715 = vmatprep.subr.mxu0 0.0
  %716 = vmatpush1.msra.mxu0 %v618
  %717 = vmatprep.subr.mxu0 0.0
  %718 = vmatpush1.msra.mxu0 %v619
  %719 = vmatprep.subr.mxu0 0.0
  %720 = vmatpush1.msra.mxu0 %v620
  %721 = vmatprep.subr.mxu0 0.0
  %722 = vmatpush1.msra.mxu0 %v621
  %723 = vmatprep.subr.mxu0 0.0
  %724 = vmatpush1.msra.mxu0 %v622
  %725 = vmatprep.subr.mxu0 0.0
  %726 = vmatpush1.msra.mxu0 %v623
  %727 = vmatprep.subr.mxu0 0.0
  %728 = vmatpush1.msra.mxu0 0.0
  %729 = vmatprep.subr.mxu0 0.0
  %730 = vmatpush1.msra.mxu0 0.0
  %731 = vmatprep.subr.mxu0 0.0
  %732 = vmatpush1.msra.mxu0 0.0
  %733 = vmatprep.subr.mxu0 0.0
  %734 = vmatpush1.msra.mxu0 0.0
  %735 = vmatprep.subr.mxu0 0.0
  %736 = vmatpush1.msra.mxu0 0.0
  %737 = vmatprep.subr.mxu0 0.0
  %738 = vmatpush1.msra.mxu0 0.0
  %739 = vmatprep.subr.mxu0 0.0
  %740 = vmatpush1.msra.mxu0 0.0
  %741 = vmatprep.subr.mxu0 0.0
  %742 = vmatpush1.msra.mxu0 0.0
  %743 = vmatprep.subr.mxu0 0.0
  %744 = vmatpush1.msra.mxu0 0.0
  %745 = vmatprep.subr.mxu0 0.0
  %746 = vmatpush1.msra.mxu0 0.0
  %747 = vmatprep.subr.mxu0 0.0
  %748 = vmatpush1.msra.mxu0 0.0
  %749 = vmatprep.subr.mxu0 0.0
  %750 = vmatpush1.msra.mxu0 0.0
  %751 = vmatprep.subr.mxu0 0.0
  %752 = vmatpush1.msra.mxu0 0.0
  %753 = vmatprep.subr.mxu0 0.0
  %754 = vmatpush1.msra.mxu0 0.0
  %755 = vmatprep.subr.mxu0 0.0
  %756 = vmatpush1.msra.mxu0 0.0
  %757 = vmatprep.subr.mxu0 0.0
  %758 = vmatpush1.msra.mxu0 0.0
  %759 = vmatprep.mubr.f32.mxu0 0.0
  %760 = vmatmul.mubr.f32.gmra.mrb[0].mxu0 %v607
  %v761 = vpop.f32.mrb[0].mxu0
  %v762 = vadd.f32 0.0, %v761
  %v763 = vpop.f32.mrb[0].mxu0
  %764 = vdwg.mxu0
  %v765 = vmul.f32 %v762, 0.001953125
  %v766 = vmul.f32 %v694, %v694
  %v767 = vsub.f32 %v765, %v766
  %v768 = vmax.f32 %v767, 0.0
  %v769 = vadd.f32 %v768, 1e-05
  %v770 = vrsqrt.pop %v769
  %v771 = vmul.f32 %v590, %v770
  %v772 = vmul.f32 %v694, %v771
  %v773 = vsub.f32 %v591, %v772
  %v774 = vld [vmem:[%s10] sm:$0xf]
  %vm775 = vcmask 31744
  %v777 = vsel %vm775, %v771, 0
  %vm779 = vcmask 1043456
  %v781 = vsel %vm779, %v774, 0
  %783 = vmatprep.subr.mxu0 0.0
  %784 = vmatpush1.msra.mxu0 %v781
  %785 = vmatprep.subr.mxu0 0.0
  %786 = vmatpush1.msra.mxu0 0.0
  %787 = vmatprep.subr.mxu0 0.0
  %788 = vmatpush1.msra.mxu0 0.0
  %789 = vmatprep.subr.mxu0 0.0
  %790 = vmatpush1.msra.mxu0 0.0
  %791 = vmatprep.subr.mxu0 0.0
  %792 = vmatpush1.msra.mxu0 0.0
  %793 = vmatprep.subr.mxu0 0.0
  %794 = vmatpush1.msra.mxu0 0.0
  %795 = vmatprep.subr.mxu0 0.0
  %796 = vmatpush1.msra.mxu0 0.0
  %797 = vmatprep.subr.mxu0 0.0
  %798 = vmatpush1.msra.mxu0 0.0
  %799 = vmatprep.subr.mxu0 0.0
  %800 = vmatpush1.msra.mxu0 0.0
  %801 = vmatprep.subr.mxu0 0.0
  %802 = vmatpush1.msra.mxu0 0.0
  %803 = vmatprep.subr.mxu0 0.0
  %804 = vmatpush1.msra.mxu0 0.0
  %805 = vmatprep.subr.mxu0 0.0
  %806 = vmatpush1.msra.mxu0 0.0
  %807 = vmatprep.subr.mxu0 0.0
  %808 = vmatpush1.msra.mxu0 0.0
  %809 = vmatprep.subr.mxu0 0.0
  %810 = vmatpush1.msra.mxu0 0.0
  %811 = vmatprep.subr.mxu0 0.0
  %812 = vmatpush1.msra.mxu0 0.0
  %813 = vmatprep.subr.mxu0 0.0
  %814 = vmatpush1.msra.mxu0 0.0
  %815 = vmatprep.subr.mxu0 0.0
  %816 = vmatpush1.msra.mxu0 0.0
  %817 = vmatprep.subr.mxu0 0.0
  %818 = vmatpush1.msra.mxu0 0.0
  %819 = vmatprep.subr.mxu0 0.0
  %820 = vmatpush1.msra.mxu0 0.0
  %821 = vmatprep.subr.mxu0 0.0
  %822 = vmatpush1.msra.mxu0 0.0
  %823 = vmatprep.subr.mxu0 0.0
  %824 = vmatpush1.msra.mxu0 0.0
  %825 = vmatprep.subr.mxu0 0.0
  %826 = vmatpush1.msra.mxu0 0.0
  %827 = vmatprep.subr.mxu0 0.0
  %828 = vmatpush1.msra.mxu0 0.0
  %829 = vmatprep.subr.mxu0 0.0
  %830 = vmatpush1.msra.mxu0 0.0
  %831 = vmatprep.subr.mxu0 0.0
  %832 = vmatpush1.msra.mxu0 0.0
  %833 = vmatprep.subr.mxu0 0.0
  %834 = vmatpush1.msra.mxu0 0.0
  %835 = vmatprep.subr.mxu0 0.0
  %836 = vmatpush1.msra.mxu0 0.0
  %837 = vmatprep.subr.mxu0 0.0
  %838 = vmatpush1.msra.mxu0 0.0
  %839 = vmatprep.subr.mxu0 0.0
  %840 = vmatpush1.msra.mxu0 0.0
  %841 = vmatprep.subr.mxu0 0.0
  %842 = vmatpush1.msra.mxu0 0.0
  %843 = vmatprep.subr.mxu0 0.0
  %844 = vmatpush1.msra.mxu0 0.0
  %845 = vmatprep.subr.mxu0 0.0
  %846 = vmatpush1.msra.mxu0 0.0
  %847 = vmatprep.mubr.f32.mxu0 0.0
  %848 = vmatmul.mubr.f32.gmra.mrb[0].mxu0 %v777
  %v849 = vpop.f32.mrb[0].mxu0
  %v850 = vadd.f32 0.0, %v849
  %v851 = vpop.f32.mrb[0].mxu0
  %852 = vdwg.mxu0
  %v854 = vsel %vm775, %v773, 0
  %856 = vmatprep.subr.mxu0 0.0
  %857 = vmatpush1.msra.mxu0 %v781
  %858 = vmatprep.subr.mxu0 0.0
  %859 = vmatpush1.msra.mxu0 0.0
  %860 = vmatprep.subr.mxu0 0.0
  %861 = vmatpush1.msra.mxu0 0.0
  %862 = vmatprep.subr.mxu0 0.0
  %863 = vmatpush1.msra.mxu0 0.0
  %864 = vmatprep.subr.mxu0 0.0
  %865 = vmatpush1.msra.mxu0 0.0
  %866 = vmatprep.subr.mxu0 0.0
  %867 = vmatpush1.msra.mxu0 0.0
  %868 = vmatprep.subr.mxu0 0.0
  %869 = vmatpush1.msra.mxu0 0.0
  %870 = vmatprep.subr.mxu0 0.0
  %871 = vmatpush1.msra.mxu0 0.0
  %872 = vmatprep.subr.mxu0 0.0
  %873 = vmatpush1.msra.mxu0 0.0
  %874 = vmatprep.subr.mxu0 0.0
  %875 = vmatpush1.msra.mxu0 0.0
  %876 = vmatprep.subr.mxu0 0.0
  %877 = vmatpush1.msra.mxu0 0.0
  %878 = vmatprep.subr.mxu0 0.0
  %879 = vmatpush1.msra.mxu0 0.0
  %880 = vmatprep.subr.mxu0 0.0
  %881 = vmatpush1.msra.mxu0 0.0
  %882 = vmatprep.subr.mxu0 0.0
  %883 = vmatpush1.msra.mxu0 0.0
  %884 = vmatprep.subr.mxu0 0.0
  %885 = vmatpush1.msra.mxu0 0.0
  %886 = vmatprep.subr.mxu0 0.0
  %887 = vmatpush1.msra.mxu0 0.0
  %888 = vmatprep.subr.mxu0 0.0
  %889 = vmatpush1.msra.mxu0 0.0
  %890 = vmatprep.subr.mxu0 0.0
  %891 = vmatpush1.msra.mxu0 0.0
  %892 = vmatprep.subr.mxu0 0.0
  %893 = vmatpush1.msra.mxu0 0.0
  %894 = vmatprep.subr.mxu0 0.0
  %895 = vmatpush1.msra.mxu0 0.0
  %896 = vmatprep.subr.mxu0 0.0
  %897 = vmatpush1.msra.mxu0 0.0
  %898 = vmatprep.subr.mxu0 0.0
  %899 = vmatpush1.msra.mxu0 0.0
  %900 = vmatprep.subr.mxu0 0.0
  %901 = vmatpush1.msra.mxu0 0.0
  %902 = vmatprep.subr.mxu0 0.0
  %903 = vmatpush1.msra.mxu0 0.0
  %904 = vmatprep.subr.mxu0 0.0
  %905 = vmatpush1.msra.mxu0 0.0
  %906 = vmatprep.subr.mxu0 0.0
  %907 = vmatpush1.msra.mxu0 0.0
  %908 = vmatprep.subr.mxu0 0.0
  %909 = vmatpush1.msra.mxu0 0.0
  %910 = vmatprep.subr.mxu0 0.0
  %911 = vmatpush1.msra.mxu0 0.0
  %912 = vmatprep.subr.mxu0 0.0
  %913 = vmatpush1.msra.mxu0 0.0
  %914 = vmatprep.subr.mxu0 0.0
  %915 = vmatpush1.msra.mxu0 0.0
  %916 = vmatprep.subr.mxu0 0.0
  %917 = vmatpush1.msra.mxu0 0.0
  %918 = vmatprep.subr.mxu0 0.0
  %919 = vmatpush1.msra.mxu0 0.0
  %920 = vmatprep.mubr.f32.mxu0 0.0
  %921 = vmatmul.mubr.f32.gmra.mrb[0].mxu0 %v854
  %v922 = vpop.f32.mrb[0].mxu0
  %v923 = vadd.f32 0.0, %v922
  %v924 = vpop.f32.mrb[0].mxu0
  %925 = vdwg.mxu0
  %v926 = vlaneseq
  %v927 = vshrl.u32 %v926, 7
  %v928 = vsub.s32 0, %v927
  %v929 = vrot.slane %v850, %v928
  %v930 = vmul.f32 %v588, %v929
  %v931 = vmul.f32 %v589, %v929
  %v932 = vlaneseq
  %v933 = vshrl.u32 %v932, 7
  %v934 = vsub.s32 0, %v933
  %v935 = vrot.slane %v923, %v934
  %v936 = vadd.f32 %v930, %v935
  %v937 = vadd.f32 %v931, %v935
  %v938 = vmax.f32 %v936, 0.0
  %v939 = vmax.f32 %v937, 0.0
  %940 = vst [vmem:[#allocation3 + $0x1] sm:$0xff] %v938
  %941 = vst [vmem:[#allocation3 + $0x9] sm:$0xff] %v939
  %v942 = vld [vmem:[%s8] sm:$0x1]
  %v944 = vlaneseq
  %v945 = vshrl.u32 %v944, 7
  %v946 = vsub.s32 0, %v945
  %v947 = vrot.slane %v942, %v946
  %v949 = vadd.f32 %v947, 0.0
  %v950 = vld [vmem:[#allocation3] sm:$0xff]
  %v951 = vld [vmem:[#allocation3 + $0x8] sm:$0xff]
  %v952 = vld [vmem:[%s6] sm:$0xff]
  %v953 = vld [vmem:[%s6 + $0x8] sm:$0xff]
  %v954 = vld [vmem:[%s6 + $0x10] sm:$0xff]
  %v955 = vld [vmem:[%s6 + $0x18] sm:$0xff]
  %v956 = vld [vmem:[%s6 + $0x20] sm:$0xff]
  %v957 = vld [vmem:[%s6 + $0x28] sm:$0xff]
  %v958 = vld [vmem:[%s6 + $0x30] sm:$0xff]
  %v959 = vld [vmem:[%s6 + $0x38] sm:$0xff]
  %v960 = vld [vmem:[%s6 + $0x40] sm:$0xff]
  %v961 = vld [vmem:[%s6 + $0x48] sm:$0xff]
  %v962 = vld [vmem:[%s6 + $0x50] sm:$0xff]
  %v963 = vld [vmem:[%s6 + $0x58] sm:$0xff]
  %v964 = vld [vmem:[%s6 + $0x60] sm:$0xff]
  %v965 = vld [vmem:[%s6 + $0x68] sm:$0xff]
  %v966 = vld [vmem:[%s6 + $0x70] sm:$0xff]
  %v967 = vld [vmem:[%s6 + $0x78] sm:$0xff]
  %968 = vmatprep.subr.mxu0 0.0
  %969 = vmatpush1.msra.mxu0 %v952
  %970 = vmatprep.subr.mxu0 0.0
  %971 = vmatpush1.msra.mxu0 %v953
  %972 = vmatprep.subr.mxu0 0.0
  %973 = vmatpush1.msra.mxu0 %v954
  %974 = vmatprep.subr.mxu0 0.0
  %975 = vmatpush1.msra.mxu0 %v955
  %976 = vmatprep.subr.mxu0 0.0
  %977 = vmatpush1.msra.mxu0 %v956
  %978 = vmatprep.subr.mxu0 0.0
  %979 = vmatpush1.msra.mxu0 %v957
  %980 = vmatprep.subr.mxu0 0.0
  %981 = vmatpush1.msra.mxu0 %v958
  %982 = vmatprep.subr.mxu0 0.0
  %983 = vmatpush1.msra.mxu0 %v959
  %984 = vmatprep.subr.mxu0 0.0
  %985 = vmatpush1.msra.mxu0 %v960
  %986 = vmatprep.subr.mxu0 0.0
  %987 = vmatpush1.msra.mxu0 %v961
  %988 = vmatprep.subr.mxu0 0.0
  %989 = vmatpush1.msra.mxu0 %v962
  %990 = vmatprep.subr.mxu0 0.0
  %991 = vmatpush1.msra.mxu0 %v963
  %992 = vmatprep.subr.mxu0 0.0
  %993 = vmatpush1.msra.mxu0 %v964
  %994 = vmatprep.subr.mxu0 0.0
  %995 = vmatpush1.msra.mxu0 %v965
  %996 = vmatprep.subr.mxu0 0.0
  %997 = vmatpush1.msra.mxu0 %v966
  %998 = vmatprep.subr.mxu0 0.0
  %999 = vmatpush1.msra.mxu0 %v967
  %1000 = vmatprep.subr.mxu0 0.0
  %1001 = vmatpush1.msra.mxu0 0.0
  %1002 = vmatprep.subr.mxu0 0.0
  %1003 = vmatpush1.msra.mxu0 0.0
  %1004 = vmatprep.subr.mxu0 0.0
  %1005 = vmatpush1.msra.mxu0 0.0
  %1006 = vmatprep.subr.mxu0 0.0
  %1007 = vmatpush1.msra.mxu0 0.0
  %1008 = vmatprep.subr.mxu0 0.0
  %1009 = vmatpush1.msra.mxu0 0.0
  %1010 = vmatprep.subr.mxu0 0.0
  %1011 = vmatpush1.msra.mxu0 0.0
  %1012 = vmatprep.subr.mxu0 0.0
  %1013 = vmatpush1.msra.mxu0 0.0
  %1014 = vmatprep.subr.mxu0 0.0
  %1015 = vmatpush1.msra.mxu0 0.0
  %1016 = vmatprep.subr.mxu0 0.0
  %1017 = vmatpush1.msra.mxu0 0.0
  %1018 = vmatprep.subr.mxu0 0.0
  %1019 = vmatpush1.msra.mxu0 0.0
  %1020 = vmatprep.subr.mxu0 0.0
  %1021 = vmatpush1.msra.mxu0 0.0
  %1022 = vmatprep.subr.mxu0 0.0
  %1023 = vmatpush1.msra.mxu0 0.0
  %1024 = vmatprep.subr.mxu0 0.0
  %1025 = vmatpush1.msra.mxu0 0.0
  %1026 = vmatprep.subr.mxu0 0.0
  %1027 = vmatpush1.msra.mxu0 0.0
  %1028 = vmatprep.subr.mxu0 0.0
  %1029 = vmatpush1.msra.mxu0 0.0
  %1030 = vmatprep.subr.mxu0 0.0
  %1031 = vmatpush1.msra.mxu0 0.0
  %1032 = vmatprep.mubr.f32.mxu0 0.0
  %1033 = vmatmul.mubr.f32.gmra.mrb[0].mxu0 %v950
  %v1034 = vpop.f32.mrb[0].mxu0
  %v1035 = vadd.f32 0.0, %v1034
  %v1036 = vpop.f32.mrb[0].mxu0
  %1037 = vmatprep.mubr.f32.mxu0 0.0
  %1038 = vmatmul.mubr.f32.gmra.mrb[0].mxu0 %v951
  %v1039 = vpop.f32.mrb[0].mxu0
  %v1040 = vadd.f32 0.0, %v1039
  %v1041 = vpop.f32.mrb[0].mxu0
  %1042 = vdwg.mxu0
  %v1043 = vadd.f32 %v949, %v1035
  %v1044 = vadd.f32 %v949, %v1040
  %v1045 = vld [vmem:[#allocation3 + $0x1] sm:$0xff]
  %v1046 = vld [vmem:[#allocation3 + $0x9] sm:$0xff]
  %s1047 = scalar_lea.vmem %s6, 128
  %v1048 = vld [vmem:[%s1047] sm:$0xff]
  %v1049 = vld [vmem:[%s1047 + $0x8] sm:$0xff]
  %v1050 = vld [vmem:[%s1047 + $0x10] sm:$0xff]
  %v1051 = vld [vmem:[%s1047 + $0x18] sm:$0xff]
  %v1052 = vld [vmem:[%s1047 + $0x20] sm:$0xff]
  %v1053 = vld [vmem:[%s1047 + $0x28] sm:$0xff]
  %v1054 = vld [vmem:[%s1047 + $0x30] sm:$0xff]
  %v1055 = vld [vmem:[%s1047 + $0x38] sm:$0xff]
  %v1056 = vld [vmem:[%s1047 + $0x40] sm:$0xff]
  %v1057 = vld [vmem:[%s1047 + $0x48] sm:$0xff]
  %v1058 = vld [vmem:[%s1047 + $0x50] sm:$0xff]
  %v1059 = vld [vmem:[%s1047 + $0x58] sm:$0xff]
  %v1060 = vld [vmem:[%s1047 + $0x60] sm:$0xff]
  %v1061 = vld [vmem:[%s1047 + $0x68] sm:$0xff]
  %v1062 = vld [vmem:[%s1047 + $0x70] sm:$0xff]
  %v1063 = vld [vmem:[%s1047 + $0x78] sm:$0xff]
  %1064 = vmatprep.subr.mxu0 0.0
  %1065 = vmatpush1.msra.mxu0 %v1048
  %1066 = vmatprep.subr.mxu0 0.0
  %1067 = vmatpush1.msra.mxu0 %v1049
  %1068 = vmatprep.subr.mxu0 0.0
  %1069 = vmatpush1.msra.mxu0 %v1050
  %1070 = vmatprep.subr.mxu0 0.0
  %1071 = vmatpush1.msra.mxu0 %v1051
  %1072 = vmatprep.subr.mxu0 0.0
  %1073 = vmatpush1.msra.mxu0 %v1052
  %1074 = vmatprep.subr.mxu0 0.0
  %1075 = vmatpush1.msra.mxu0 %v1053
  %1076 = vmatprep.subr.mxu0 0.0
  %1077 = vmatpush1.msra.mxu0 %v1054
  %1078 = vmatprep.subr.mxu0 0.0
  %1079 = vmatpush1.msra.mxu0 %v1055
  %1080 = vmatprep.subr.mxu0 0.0
  %1081 = vmatpush1.msra.mxu0 %v1056
  %1082 = vmatprep.subr.mxu0 0.0
  %1083 = vmatpush1.msra.mxu0 %v1057
  %1084 = vmatprep.subr.mxu0 0.0
  %1085 = vmatpush1.msra.mxu0 %v1058
  %1086 = vmatprep.subr.mxu0 0.0
  %1087 = vmatpush1.msra.mxu0 %v1059
  %1088 = vmatprep.subr.mxu0 0.0
  %1089 = vmatpush1.msra.mxu0 %v1060
  %1090 = vmatprep.subr.mxu0 0.0
  %1091 = vmatpush1.msra.mxu0 %v1061
  %1092 = vmatprep.subr.mxu0 0.0
  %1093 = vmatpush1.msra.mxu0 %v1062
  %1094 = vmatprep.subr.mxu0 0.0
  %1095 = vmatpush1.msra.mxu0 %v1063
  %1096 = vmatprep.subr.mxu0 0.0
  %1097 = vmatpush1.msra.mxu0 0.0
  %1098 = vmatprep.subr.mxu0 0.0
  %1099 = vmatpush1.msra.mxu0 0.0
  %1100 = vmatprep.subr.mxu0 0.0
  %1101 = vmatpush1.msra.mxu0 0.0
  %1102 = vmatprep.subr.mxu0 0.0
  %1103 = vmatpush1.msra.mxu0 0.0
  %1104 = vmatprep.subr.mxu0 0.0
  %1105 = vmatpush1.msra.mxu0 0.0
  %1106 = vmatprep.subr.mxu0 0.0
  %1107 = vmatpush1.msra.mxu0 0.0
  %1108 = vmatprep.subr.mxu0 0.0
  %1109 = vmatpush1.msra.mxu0 0.0
  %1110 = vmatprep.subr.mxu0 0.0
  %1111 = vmatpush1.msra.mxu0 0.0
  %1112 = vmatprep.subr.mxu0 0.0
  %1113 = vmatpush1.msra.mxu0 0.0
  %1114 = vmatprep.subr.mxu0 0.0
  %1115 = vmatpush1.msra.mxu0 0.0
  %1116 = vmatprep.subr.mxu0 0.0
  %1117 = vmatpush1.msra.mxu0 0.0
  %1118 = vmatprep.subr.mxu0 0.0
  %1119 = vmatpush1.msra.mxu0 0.0
  %1120 = vmatprep.subr.mxu0 0.0
  %1121 = vmatpush1.msra.mxu0 0.0
  %1122 = vmatprep.subr.mxu0 0.0
  %1123 = vmatpush1.msra.mxu0 0.0
  %1124 = vmatprep.subr.mxu0 0.0
  %1125 = vmatpush1.msra.mxu0 0.0
  %1126 = vmatprep.subr.mxu0 0.0
  %1127 = vmatpush1.msra.mxu0 0.0
  %1128 = vmatprep.mubr.f32.mxu0 0.0
  %1129 = vmatmul.mubr.f32.gmra.mrb[0].mxu0 %v1045
  %v1130 = vpop.f32.mrb[0].mxu0
  %v1131 = vadd.f32 0.0, %v1130
  %v1132 = vpop.f32.mrb[0].mxu0
  %1133 = vmatprep.mubr.f32.mxu0 0.0
  %1134 = vmatmul.mubr.f32.gmra.mrb[0].mxu0 %v1046
  %v1135 = vpop.f32.mrb[0].mxu0
  %v1136 = vadd.f32 0.0, %v1135
  %v1137 = vpop.f32.mrb[0].mxu0
  %1138 = vdwg.mxu0
  %v1139 = vadd.f32 %v1043, %v1131
  %v1140 = vadd.f32 %v1044, %v1136
  %v1141 = vld [vmem:[#allocation3 + $0x2] sm:$0xff]
  %v1142 = vld [vmem:[#allocation3 + $0xa] sm:$0xff]
  %s1143 = scalar_lea.vmem %s6, 256
  %v1144 = vld [vmem:[%s1143] sm:$0xff]
  %v1145 = vld [vmem:[%s1143 + $0x8] sm:$0xff]
  %v1146 = vld [vmem:[%s1143 + $0x10] sm:$0xff]
  %v1147 = vld [vmem:[%s1143 + $0x18] sm:$0xff]
  %v1148 = vld [vmem:[%s1143 + $0x20] sm:$0xff]
  %v1149 = vld [vmem:[%s1143 + $0x28] sm:$0xff]
  %v1150 = vld [vmem:[%s1143 + $0x30] sm:$0xff]
  %v1151 = vld [vmem:[%s1143 + $0x38] sm:$0xff]
  %v1152 = vld [vmem:[%s1143 + $0x40] sm:$0xff]
  %v1153 = vld [vmem:[%s1143 + $0x48] sm:$0xff]
  %v1154 = vld [vmem:[%s1143 + $0x50] sm:$0xff]
  %v1155 = vld [vmem:[%s1143 + $0x58] sm:$0xff]
  %v1156 = vld [vmem:[%s1143 + $0x60] sm:$0xff]
  %v1157 = vld [vmem:[%s1143 + $0x68] sm:$0xff]
  %v1158 = vld [vmem:[%s1143 + $0x70] sm:$0xff]
  %v1159 = vld [vmem:[%s1143 + $0x78] sm:$0xff]
  %1160 = vmatprep.subr.mxu0 0.0
  %1161 = vmatpush1.msra.mxu0 %v1144
  %1162 = vmatprep.subr.mxu0 0.0
  %1163 = vmatpush1.msra.mxu0 %v1145
  %1164 = vmatprep.subr.mxu0 0.0
  %1165 = vmatpush1.msra.mxu0 %v1146
  %1166 = vmatprep.subr.mxu0 0.0
  %1167 = vmatpush1.msra.mxu0 %v1147
  %1168 = vmatprep.subr.mxu0 0.0
  %1169 = vmatpush1.msra.mxu0 %v1148
  %1170 = vmatprep.subr.mxu0 0.0
  %1171 = vmatpush1.msra.mxu0 %v1149
  %1172 = vmatprep.subr.mxu0 0.0
  %1173 = vmatpush1.msra.mxu0 %v1150
  %1174 = vmatprep.subr.mxu0 0.0
  %1175 = vmatpush1.msra.mxu0 %v1151
  %1176 = vmatprep.subr.mxu0 0.0
  %1177 = vmatpush1.msra.mxu0 %v1152
  %1178 = vmatprep.subr.mxu0 0.0
  %1179 = vmatpush1.msra.mxu0 %v1153
  %1180 = vmatprep.subr.mxu0 0.0
  %1181 = vmatpush1.msra.mxu0 %v1154
  %1182 = vmatprep.subr.mxu0 0.0
  %1183 = vmatpush1.msra.mxu0 %v1155
  %1184 = vmatprep.subr.mxu0 0.0
  %1185 = vmatpush1.msra.mxu0 %v1156
  %1186 = vmatprep.subr.mxu0 0.0
  %1187 = vmatpush1.msra.mxu0 %v1157
  %1188 = vmatprep.subr.mxu0 0.0
  %1189 = vmatpush1.msra.mxu0 %v1158
  %1190 = vmatprep.subr.mxu0 0.0
  %1191 = vmatpush1.msra.mxu0 %v1159
  %1192 = vmatprep.subr.mxu0 0.0
  %1193 = vmatpush1.msra.mxu0 0.0
  %1194 = vmatprep.subr.mxu0 0.0
  %1195 = vmatpush1.msra.mxu0 0.0
  %1196 = vmatprep.subr.mxu0 0.0
  %1197 = vmatpush1.msra.mxu0 0.0
  %1198 = vmatprep.subr.mxu0 0.0
  %1199 = vmatpush1.msra.mxu0 0.0
  %1200 = vmatprep.subr.mxu0 0.0
  %1201 = vmatpush1.msra.mxu0 0.0
  %1202 = vmatprep.subr.mxu0 0.0
  %1203 = vmatpush1.msra.mxu0 0.0
  %1204 = vmatprep.subr.mxu0 0.0
  %1205 = vmatpush1.msra.mxu0 0.0
  %1206 = vmatprep.subr.mxu0 0.0
  %1207 = vmatpush1.msra.mxu0 0.0
  %1208 = vmatprep.subr.mxu0 0.0
  %1209 = vmatpush1.msra.mxu0 0.0
  %1210 = vmatprep.subr.mxu0 0.0
  %1211 = vmatpush1.msra.mxu0 0.0
  %1212 = vmatprep.subr.mxu0 0.0
  %1213 = vmatpush1.msra.mxu0 0.0
  %1214 = vmatprep.subr.mxu0 0.0
  %1215 = vmatpush1.msra.mxu0 0.0
  %1216 = vmatprep.subr.mxu0 0.0
  %1217 = vmatpush1.msra.mxu0 0.0
  %1218 = vmatprep.subr.mxu0 0.0
  %1219 = vmatpush1.msra.mxu0 0.0
  %1220 = vmatprep.subr.mxu0 0.0
  %1221 = vmatpush1.msra.mxu0 0.0
  %1222 = vmatprep.subr.mxu0 0.0
  %1223 = vmatpush1.msra.mxu0 0.0
  %1224 = vmatprep.mubr.f32.mxu0 0.0
  %1225 = vmatmul.mubr.f32.gmra.mrb[0].mxu0 %v1141
  %v1226 = vpop.f32.mrb[0].mxu0
  %v1227 = vadd.f32 0.0, %v1226
  %v1228 = vpop.f32.mrb[0].mxu0
  %1229 = vmatprep.mubr.f32.mxu0 0.0
  %1230 = vmatmul.mubr.f32.gmra.mrb[0].mxu0 %v1142
  %v1231 = vpop.f32.mrb[0].mxu0
  %v1232 = vadd.f32 0.0, %v1231
  %v1233 = vpop.f32.mrb[0].mxu0
  %1234 = vdwg.mxu0
  %v1235 = vadd.f32 %v1139, %v1227
  %v1236 = vadd.f32 %v1140, %v1232
  %v1237 = vld [vmem:[%s9 + $0x2] sm:$0x1]
  %v1238 = vld [vmem:[%s9 + $0x3] sm:$0x1]
  %v1239 = vadd.f32 %v1235, %v1236
  %v1240 = vrot.slane %v1239, 4
  %v1241 = vadd.f32 %v1239, %v1240
  %v1242 = vrot.slane %v1241, 2
  %v1243 = vadd.f32 %v1241, %v1242
  %v1244 = vrot.slane %v1243, 1
  %v1245 = vadd.f32 %v1243, %v1244
  %v1246 = vmul.f32 %v1235, %v1235
  %v1247 = vmul.f32 %v1236, %v1236
  %v1248 = vadd.f32 %v1246, %v1247
  %v1249 = vrot.slane %v1248, 4
  %v1250 = vadd.f32 %v1248, %v1249
  %v1251 = vrot.slane %v1250, 2
  %v1252 = vadd.f32 %v1250, %v1251
  %v1253 = vrot.slane %v1252, 1
  %v1254 = vadd.f32 %v1252, %v1253
  %v1255 = vld [vmem:[%s11] sm:$0xff]
  %v1256 = vld [vmem:[%s11 + $0x8] sm:$0xff]
  %v1257 = vld [vmem:[%s11 + $0x10] sm:$0xff]
  %v1258 = vld [vmem:[%s11 + $0x18] sm:$0xff]
  %v1259 = vld [vmem:[%s11 + $0x20] sm:$0xff]
  %v1260 = vld [vmem:[%s11 + $0x28] sm:$0xff]
  %v1261 = vld [vmem:[%s11 + $0x30] sm:$0xff]
  %v1262 = vld [vmem:[%s11 + $0x38] sm:$0xff]
  %v1263 = vld [vmem:[%s11 + $0x40] sm:$0xff]
  %v1264 = vld [vmem:[%s11 + $0x48] sm:$0xff]
  %v1265 = vld [vmem:[%s11 + $0x50] sm:$0xff]
  %v1266 = vld [vmem:[%s11 + $0x58] sm:$0xff]
  %v1267 = vld [vmem:[%s11 + $0x60] sm:$0xff]
  %v1268 = vld [vmem:[%s11 + $0x68] sm:$0xff]
  %v1269 = vld [vmem:[%s11 + $0x70] sm:$0xff]
  %v1270 = vld [vmem:[%s11 + $0x78] sm:$0xff]
  %1271 = vmatprep.subr.mxu0 0.0
  %1272 = vmatpush1.msra.mxu0 %v1255
  %1273 = vmatprep.subr.mxu0 0.0
  %1274 = vmatpush1.msra.mxu0 %v1256
  %1275 = vmatprep.subr.mxu0 0.0
  %1276 = vmatpush1.msra.mxu0 %v1257
  %1277 = vmatprep.subr.mxu0 0.0
  %1278 = vmatpush1.msra.mxu0 %v1258
  %1279 = vmatprep.subr.mxu0 0.0
  %1280 = vmatpush1.msra.mxu0 %v1259
  %1281 = vmatprep.subr.mxu0 0.0
  %1282 = vmatpush1.msra.mxu0 %v1260
  %1283 = vmatprep.subr.mxu0 0.0
  %1284 = vmatpush1.msra.mxu0 %v1261
  %1285 = vmatprep.subr.mxu0 0.0
  %1286 = vmatpush1.msra.mxu0 %v1262
  %1287 = vmatprep.subr.mxu0 0.0
  %1288 = vmatpush1.msra.mxu0 %v1263
  %1289 = vmatprep.subr.mxu0 0.0
  %1290 = vmatpush1.msra.mxu0 %v1264
  %1291 = vmatprep.subr.mxu0 0.0
  %1292 = vmatpush1.msra.mxu0 %v1265
  %1293 = vmatprep.subr.mxu0 0.0
  %1294 = vmatpush1.msra.mxu0 %v1266
  %1295 = vmatprep.subr.mxu0 0.0
  %1296 = vmatpush1.msra.mxu0 %v1267
  %1297 = vmatprep.subr.mxu0 0.0
  %1298 = vmatpush1.msra.mxu0 %v1268
  %1299 = vmatprep.subr.mxu0 0.0
  %1300 = vmatpush1.msra.mxu0 %v1269
  %1301 = vmatprep.subr.mxu0 0.0
  %1302 = vmatpush1.msra.mxu0 %v1270
  %1303 = vmatprep.subr.mxu0 0.0
  %1304 = vmatpush1.msra.mxu0 0.0
  %1305 = vmatprep.subr.mxu0 0.0
  %1306 = vmatpush1.msra.mxu0 0.0
  %1307 = vmatprep.subr.mxu0 0.0
  %1308 = vmatpush1.msra.mxu0 0.0
  %1309 = vmatprep.subr.mxu0 0.0
  %1310 = vmatpush1.msra.mxu0 0.0
  %1311 = vmatprep.subr.mxu0 0.0
  %1312 = vmatpush1.msra.mxu0 0.0
  %1313 = vmatprep.subr.mxu0 0.0
  %1314 = vmatpush1.msra.mxu0 0.0
  %1315 = vmatprep.subr.mxu0 0.0
  %1316 = vmatpush1.msra.mxu0 0.0
  %1317 = vmatprep.subr.mxu0 0.0
  %1318 = vmatpush1.msra.mxu0 0.0
  %1319 = vmatprep.subr.mxu0 0.0
  %1320 = vmatpush1.msra.mxu0 0.0
  %1321 = vmatprep.subr.mxu0 0.0
  %1322 = vmatpush1.msra.mxu0 0.0
  %1323 = vmatprep.subr.mxu0 0.0
  %1324 = vmatpush1.msra.mxu0 0.0
  %1325 = vmatprep.subr.mxu0 0.0
  %1326 = vmatpush1.msra.mxu0 0.0
  %1327 = vmatprep.subr.mxu0 0.0
  %1328 = vmatpush1.msra.mxu0 0.0
  %1329 = vmatprep.subr.mxu0 0.0
  %1330 = vmatpush1.msra.mxu0 0.0
  %1331 = vmatprep.subr.mxu0 0.0
  %1332 = vmatpush1.msra.mxu0 0.0
  %1333 = vmatprep.subr.mxu0 0.0
  %1334 = vmatpush1.msra.mxu0 0.0
  %1335 = vmatprep.mubr.f32.mxu0 0.0
  %1336 = vmatmul.mubr.f32.gmra.mrb[0].mxu0 %v1245
  %v1337 = vpop.f32.mrb[0].mxu0
  %v1338 = vadd.f32 0.0, %v1337
  %v1339 = vpop.f32.mrb[0].mxu0
  %1340 = vdwg.mxu0
  %v1341 = vmul.f32 %v1338, 0.001953125
  %1342 = vmatprep.subr.mxu0 0.0
  %1343 = vmatpush1.msra.mxu0 %v1255
  %1344 = vmatprep.subr.mxu0 0.0
  %1345 = vmatpush1.msra.mxu0 %v1256
  %1346 = vmatprep.subr.mxu0 0.0
  %1347 = vmatpush1.msra.mxu0 %v1257
  %1348 = vmatprep.subr.mxu0 0.0
  %1349 = vmatpush1.msra.mxu0 %v1258
  %1350 = vmatprep.subr.mxu0 0.0
  %1351 = vmatpush1.msra.mxu0 %v1259
  %1352 = vmatprep.subr.mxu0 0.0
  %1353 = vmatpush1.msra.mxu0 %v1260
  %1354 = vmatprep.subr.mxu0 0.0
  %1355 = vmatpush1.msra.mxu0 %v1261
  %1356 = vmatprep.subr.mxu0 0.0
  %1357 = vmatpush1.msra.mxu0 %v1262
  %1358 = vmatprep.subr.mxu0 0.0
  %1359 = vmatpush1.msra.mxu0 %v1263
  %1360 = vmatprep.subr.mxu0 0.0
  %1361 = vmatpush1.msra.mxu0 %v1264
  %1362 = vmatprep.subr.mxu0 0.0
  %1363 = vmatpush1.msra.mxu0 %v1265
  %1364 = vmatprep.subr.mxu0 0.0
  %1365 = vmatpush1.msra.mxu0 %v1266
  %1366 = vmatprep.subr.mxu0 0.0
  %1367 = vmatpush1.msra.mxu0 %v1267
  %1368 = vmatprep.subr.mxu0 0.0
  %1369 = vmatpush1.msra.mxu0 %v1268
  %1370 = vmatprep.subr.mxu0 0.0
  %1371 = vmatpush1.msra.mxu0 %v1269
  %1372 = vmatprep.subr.mxu0 0.0
  %1373 = vmatpush1.msra.mxu0 %v1270
  %1374 = vmatprep.subr.mxu0 0.0
  %1375 = vmatpush1.msra.mxu0 0.0
  %1376 = vmatprep.subr.mxu0 0.0
  %1377 = vmatpush1.msra.mxu0 0.0
  %1378 = vmatprep.subr.mxu0 0.0
  %1379 = vmatpush1.msra.mxu0 0.0
  %1380 = vmatprep.subr.mxu0 0.0
  %1381 = vmatpush1.msra.mxu0 0.0
  %1382 = vmatprep.subr.mxu0 0.0
  %1383 = vmatpush1.msra.mxu0 0.0
  %1384 = vmatprep.subr.mxu0 0.0
  %1385 = vmatpush1.msra.mxu0 0.0
  %1386 = vmatprep.subr.mxu0 0.0
  %1387 = vmatpush1.msra.mxu0 0.0
  %1388 = vmatprep.subr.mxu0 0.0
  %1389 = vmatpush1.msra.mxu0 0.0
  %1390 = vmatprep.subr.mxu0 0.0
  %1391 = vmatpush1.msra.mxu0 0.0
  %1392 = vmatprep.subr.mxu0 0.0
  %1393 = vmatpush1.msra.mxu0 0.0
  %1394 = vmatprep.subr.mxu0 0.0
  %1395 = vmatpush1.msra.mxu0 0.0
  %1396 = vmatprep.subr.mxu0 0.0
  %1397 = vmatpush1.msra.mxu0 0.0
  %1398 = vmatprep.subr.mxu0 0.0
  %1399 = vmatpush1.msra.mxu0 0.0
  %1400 = vmatprep.subr.mxu0 0.0
  %1401 = vmatpush1.msra.mxu0 0.0
  %1402 = vmatprep.subr.mxu0 0.0
  %1403 = vmatpush1.msra.mxu0 0.0
  %1404 = vmatprep.subr.mxu0 0.0
  %1405 = vmatpush1.msra.mxu0 0.0
  %1406 = vmatprep.mubr.f32.mxu0 0.0
  %1407 = vmatmul.mubr.f32.gmra.mrb[0].mxu0 %v1254
  %v1408 = vpop.f32.mrb[0].mxu0
  %v1409 = vadd.f32 0.0, %v1408
  %v1410 = vpop.f32.mrb[0].mxu0
  %1411 = vdwg.mxu0
  %v1412 = vmul.f32 %v1409, 0.001953125
  %v1413 = vmul.f32 %v1341, %v1341
  %v1414 = vsub.f32 %v1412, %v1413
  %v1415 = vmax.f32 %v1414, 0.0
  %v1416 = vadd.f32 %v1415, 1e-05
  %v1417 = vrsqrt.pop %v1416
  %v1418 = vmul.f32 %v1237, %v1417
  %v1419 = vmul.f32 %v1341, %v1418
  %v1420 = vsub.f32 %v1238, %v1419
  %v1421 = vld [vmem:[%s10] sm:$0xf]
  %v1423 = vsel %vm775, %v1418, 0
  %v1426 = vsel %vm779, %v1421, 0
  %1428 = vmatprep.subr.mxu0 0.0
  %1429 = vmatpush1.msra.mxu0 %v1426
  %1430 = vmatprep.subr.mxu0 0.0
  %1431 = vmatpush1.msra.mxu0 0.0
  %1432 = vmatprep.subr.mxu0 0.0
  %1433 = vmatpush1.msra.mxu0 0.0
  %1434 = vmatprep.subr.mxu0 0.0
  %1435 = vmatpush1.msra.mxu0 0.0
  %1436 = vmatprep.subr.mxu0 0.0
  %1437 = vmatpush1.msra.mxu0 0.0
  %1438 = vmatprep.subr.mxu0 0.0
  %1439 = vmatpush1.msra.mxu0 0.0
  %1440 = vmatprep.subr.mxu0 0.0
  %1441 = vmatpush1.msra.mxu0 0.0
  %1442 = vmatprep.subr.mxu0 0.0
  %1443 = vmatpush1.msra.mxu0 0.0
  %1444 = vmatprep.subr.mxu0 0.0
  %1445 = vmatpush1.msra.mxu0 0.0
  %1446 = vmatprep.subr.mxu0 0.0
  %1447 = vmatpush1.msra.mxu0 0.0
  %1448 = vmatprep.subr.mxu0 0.0
  %1449 = vmatpush1.msra.mxu0 0.0
  %1450 = vmatprep.subr.mxu0 0.0
  %1451 = vmatpush1.msra.mxu0 0.0
  %1452 = vmatprep.subr.mxu0 0.0
  %1453 = vmatpush1.msra.mxu0 0.0
  %1454 = vmatprep.subr.mxu0 0.0
  %1455 = vmatpush1.msra.mxu0 0.0
  %1456 = vmatprep.subr.mxu0 0.0
  %1457 = vmatpush1.msra.mxu0 0.0
  %1458 = vmatprep.subr.mxu0 0.0
  %1459 = vmatpush1.msra.mxu0 0.0
  %1460 = vmatprep.subr.mxu0 0.0
  %1461 = vmatpush1.msra.mxu0 0.0
  %1462 = vmatprep.subr.mxu0 0.0
  %1463 = vmatpush1.msra.mxu0 0.0
  %1464 = vmatprep.subr.mxu0 0.0
  %1465 = vmatpush1.msra.mxu0 0.0
  %1466 = vmatprep.subr.mxu0 0.0
  %1467 = vmatpush1.msra.mxu0 0.0
  %1468 = vmatprep.subr.mxu0 0.0
  %1469 = vmatpush1.msra.mxu0 0.0
  %1470 = vmatprep.subr.mxu0 0.0
  %1471 = vmatpush1.msra.mxu0 0.0
  %1472 = vmatprep.subr.mxu0 0.0
  %1473 = vmatpush1.msra.mxu0 0.0
  %1474 = vmatprep.subr.mxu0 0.0
  %1475 = vmatpush1.msra.mxu0 0.0
  %1476 = vmatprep.subr.mxu0 0.0
  %1477 = vmatpush1.msra.mxu0 0.0
  %1478 = vmatprep.subr.mxu0 0.0
  %1479 = vmatpush1.msra.mxu0 0.0
  %1480 = vmatprep.subr.mxu0 0.0
  %1481 = vmatpush1.msra.mxu0 0.0
  %1482 = vmatprep.subr.mxu0 0.0
  %1483 = vmatpush1.msra.mxu0 0.0
  %1484 = vmatprep.subr.mxu0 0.0
  %1485 = vmatpush1.msra.mxu0 0.0
  %1486 = vmatprep.subr.mxu0 0.0
  %1487 = vmatpush1.msra.mxu0 0.0
  %1488 = vmatprep.subr.mxu0 0.0
  %1489 = vmatpush1.msra.mxu0 0.0
  %1490 = vmatprep.subr.mxu0 0.0
  %1491 = vmatpush1.msra.mxu0 0.0
  %1492 = vmatprep.mubr.f32.mxu0 0.0
  %1493 = vmatmul.mubr.f32.gmra.mrb[0].mxu0 %v1423
  %v1494 = vpop.f32.mrb[0].mxu0
  %v1495 = vadd.f32 0.0, %v1494
  %v1496 = vpop.f32.mrb[0].mxu0
  %1497 = vdwg.mxu0
  %v1499 = vsel %vm775, %v1420, 0
  %1501 = vmatprep.subr.mxu0 0.0
  %1502 = vmatpush1.msra.mxu0 %v1426
  %1503 = vmatprep.subr.mxu0 0.0
  %1504 = vmatpush1.msra.mxu0 0.0
  %1505 = vmatprep.subr.mxu0 0.0
  %1506 = vmatpush1.msra.mxu0 0.0
  %1507 = vmatprep.subr.mxu0 0.0
  %1508 = vmatpush1.msra.mxu0 0.0
  %1509 = vmatprep.subr.mxu0 0.0
  %1510 = vmatpush1.msra.mxu0 0.0
  %1511 = vmatprep.subr.mxu0 0.0
  %1512 = vmatpush1.msra.mxu0 0.0
  %1513 = vmatprep.subr.mxu0 0.0
  %1514 = vmatpush1.msra.mxu0 0.0
  %1515 = vmatprep.subr.mxu0 0.0
  %1516 = vmatpush1.msra.mxu0 0.0
  %1517 = vmatprep.subr.mxu0 0.0
  %1518 = vmatpush1.msra.mxu0 0.0
  %1519 = vmatprep.subr.mxu0 0.0
  %1520 = vmatpush1.msra.mxu0 0.0
  %1521 = vmatprep.subr.mxu0 0.0
  %1522 = vmatpush1.msra.mxu0 0.0
  %1523 = vmatprep.subr.mxu0 0.0
  %1524 = vmatpush1.msra.mxu0 0.0
  %1525 = vmatprep.subr.mxu0 0.0
  %1526 = vmatpush1.msra.mxu0 0.0
  %1527 = vmatprep.subr.mxu0 0.0
  %1528 = vmatpush1.msra.mxu0 0.0
  %1529 = vmatprep.subr.mxu0 0.0
  %1530 = vmatpush1.msra.mxu0 0.0
  %1531 = vmatprep.subr.mxu0 0.0
  %1532 = vmatpush1.msra.mxu0 0.0
  %1533 = vmatprep.subr.mxu0 0.0
  %1534 = vmatpush1.msra.mxu0 0.0
  %1535 = vmatprep.subr.mxu0 0.0
  %1536 = vmatpush1.msra.mxu0 0.0
  %1537 = vmatprep.subr.mxu0 0.0
  %1538 = vmatpush1.msra.mxu0 0.0
  %1539 = vmatprep.subr.mxu0 0.0
  %1540 = vmatpush1.msra.mxu0 0.0
  %1541 = vmatprep.subr.mxu0 0.0
  %1542 = vmatpush1.msra.mxu0 0.0
  %1543 = vmatprep.subr.mxu0 0.0
  %1544 = vmatpush1.msra.mxu0 0.0
  %1545 = vmatprep.subr.mxu0 0.0
  %1546 = vmatpush1.msra.mxu0 0.0
  %1547 = vmatprep.subr.mxu0 0.0
  %1548 = vmatpush1.msra.mxu0 0.0
  %1549 = vmatprep.subr.mxu0 0.0
  %1550 = vmatpush1.msra.mxu0 0.0
  %1551 = vmatprep.subr.mxu0 0.0
  %1552 = vmatpush1.msra.mxu0 0.0
  %1553 = vmatprep.subr.mxu0 0.0
  %1554 = vmatpush1.msra.mxu0 0.0
  %1555 = vmatprep.subr.mxu0 0.0
  %1556 = vmatpush1.msra.mxu0 0.0
  %1557 = vmatprep.subr.mxu0 0.0
  %1558 = vmatpush1.msra.mxu0 0.0
  %1559 = vmatprep.subr.mxu0 0.0
  %1560 = vmatpush1.msra.mxu0 0.0
  %1561 = vmatprep.subr.mxu0 0.0
  %1562 = vmatpush1.msra.mxu0 0.0
  %1563 = vmatprep.subr.mxu0 0.0
  %1564 = vmatpush1.msra.mxu0 0.0
  %1565 = vmatprep.mubr.f32.mxu0 0.0
  %1566 = vmatmul.mubr.f32.gmra.mrb[0].mxu0 %v1499
  %v1567 = vpop.f32.mrb[0].mxu0
  %v1568 = vadd.f32 0.0, %v1567
  %v1569 = vpop.f32.mrb[0].mxu0
  %1570 = vdwg.mxu0
  %v1571 = vlaneseq
  %v1572 = vshrl.u32 %v1571, 7
  %v1573 = vsub.s32 0, %v1572
  %v1574 = vrot.slane %v1495, %v1573
  %v1575 = vmul.f32 %v1235, %v1574
  %v1576 = vmul.f32 %v1236, %v1574
  %v1577 = vlaneseq
  %v1578 = vshrl.u32 %v1577, 7
  %v1579 = vsub.s32 0, %v1578
  %v1580 = vrot.slane %v1568, %v1579
  %v1581 = vadd.f32 %v1575, %v1580
  %v1582 = vadd.f32 %v1576, %v1580
  %v1583 = vmax.f32 %v1581, 0.0
  %v1584 = vmax.f32 %v1582, 0.0
  %1585 = vst [vmem:[%s12] sm:$0xff] %v1583
  %1586 = vst [vmem:[%s12 + $0x8] sm:$0xff] %v1584
  // Predicated region
  $region50: #{up_forward.1} parent=0 // pred_check
    _
  $region51: #{up_forward.1} parent=0 // pred_check_branch
    %1588 = sbr.rel (0) target = $region53
  $region52: #{up_forward.1} parent=0 // pred_region
    _
  $region53: #{up_forward.1} parent=0 // pred_fallthru
    _
  // Predicated region
  $region54: #{up_forward.1} parent=0 // pred_check
    _
  $region55: #{up_forward.1} parent=0 // pred_check_branch
    %1590 = sbr.rel (0) target = $region57
  $region56: #{up_forward.1} parent=0 // pred_region
    _
  $region57: #{up_forward.1} parent=0 // pred_fallthru
    _

</llo_original>
